<compile_context>
chip_gen: v5e
topology: v5e:2x2
jax: 0.10.0
libtpu: 0.0.40
codegen_flags: <defaults>
</compile_context>

<pallas_src>
from functools import partial

import jax
import jax.numpy as jnp
from jax.experimental import pallas as pl
from jax.experimental.pallas import tpu as pltpu


def _round_up(x, m):
    return ((x + m - 1) // m) * m


def _choose_tile(batch):
    """Pick the batch tile size TB.

    - Small batches split into >= 2 grid steps (v7x dual-TensorCore sharding
      via dimension_semantics=("parallel",)).
    - Large batches pick TB from {512, 256, 128} minimizing padded rows
      (wasted MXU work + link writeback), tie-broken toward larger tiles.
    """
    b8 = _round_up(batch, 8)
    target = 512
    if b8 <= 16:
        return b8                                  # too small to split
    if b8 <= 2 * target:
        return _round_up(-(-b8 // 2), 8)           # at least 2 grid steps
    cands = (512, 256, 128)
    waste = [(_round_up(b8, t) - b8, i) for i, t in enumerate(cands)]
    return cands[min(waste)[1]]


def _mlp_kernel(x_ref, w1_ref, b1_ref, w2_ref, b2_ref, w3r_ref, b3_ref,
                out_ref, link_ref):
    # Layer 0: Linear(2E -> 1024) + ReLU.  x is the lane-padded concatenation
    # [drug | target | 0...]; W1's extra rows are zero, so padded lanes
    # contribute nothing.  bf16 MXU operands, f32 accumulate, f32 epilogue
    # (eval-mode Dropout = identity).
    h1 = jnp.dot(x_ref[...], w1_ref[...], preferred_element_type=jnp.float32)
    h1 = jnp.maximum(h1 + b1_ref[...], 0.0)

    # Layer 1: Linear(1024 -> 512) + ReLU (bf16 MXU operands, f32 accumulate).
    h2 = jnp.dot(h1.astype(jnp.bfloat16), w2_ref[...],
                 preferred_element_type=jnp.float32)
    h2 = jnp.maximum(h2 + b2_ref[...], 0.0)
    link_ref[...] = h2.astype(link_ref.dtype)

    # Layer 2: Linear(512 -> 1).  Keep the N=1 matmul off the MXU: VPU
    # multiply, lane-aligned 4:1 VPU pre-reduce (512 -> 128 lanes), then a
    # single 128-lane XLU reduction.
    p = h2 * w3r_ref[...]
    h2_dim = p.shape[-1]
    if h2_dim > 128 and h2_dim % 128 == 0:
        s = p[:, 0:128]
        for c in range(1, h2_dim // 128):
            s = s + p[:, c * 128:(c + 1) * 128]
    else:
        s = p
    out_ref[...] = (jnp.sum(s, axis=-1, keepdims=True)
                    + b3_ref[...]).astype(out_ref.dtype)


@partial(jax.jit, static_argnames=("link_dtype",))
def predictor_forward(drug_id, target_id, drug_embedding, target_embedding,
                      params, link_dtype=jnp.float32):
    """Replicates Predictor.forward (prediction_mode='cat'), eval mode."""
    w1, b1, w2, b2, w3_row, b3 = params
    Kp, H1 = w1.shape
    H2 = w2.shape[1]
    OUT = b3.shape[1]
    E = drug_embedding.shape[1]

    # XLA glue: row gathers, 'cat', bf16 cast, zero-pad lanes to Kp.
    # (Fusing the gather into the kernel via PrefetchScalarGridSpec is only
    # worthwhile for large B / large tables; at these shapes it is <10% of
    # HBM traffic.)
    d = drug_embedding[drug_id.astype(jnp.int32)]
    t = target_embedding[target_id.astype(jnp.int32)]
    x = jnp.concatenate([d, t], axis=-1).astype(jnp.bfloat16)
    B = x.shape[0]
    if Kp != 2 * E:
        x = jnp.pad(x, ((0, 0), (0, Kp - 2 * E)))

    TB = _choose_tile(B)
    Bp = _round_up(B, TB)
    if Bp != B:
        x = jnp.pad(x, ((0, Bp - B), (0, 0)))
    grid = (Bp // TB,)

    flops = 2 * Bp * (Kp * H1 + H1 * H2 + H2 * OUT)
    bytes_accessed = (
        2 * int(x.size)                                      # bf16 activations
        + 2 * (int(w1.size) + int(w2.size))                  # bf16 weights
        + 4 * (int(b1.size) + int(b2.size)
               + int(w3_row.size) + int(b3.size))            # f32 params
        + 4 * Bp * OUT                                       # f32 predictions
        + jnp.dtype(link_dtype).itemsize * Bp * H2)          # link writeback
    cost = pl.CostEstimate(flops=flops, transcendentals=0,
                           bytes_accessed=bytes_accessed)

    out, link = pl.pallas_call(
        _mlp_kernel,
        out_shape=(
            jax.ShapeDtypeStruct((Bp, OUT), jnp.float32),    # final prediction
            jax.ShapeDtypeStruct((Bp, H2), link_dtype),      # link_embeddings
        ),
        grid=grid,
        in_specs=[
            pl.BlockSpec((TB, Kp), lambda i: (i, 0)),        # x tile (pipelined)
            pl.BlockSpec((Kp, H1), lambda i: (0, 0)),        # W1 (VMEM-resident)
            pl.BlockSpec((1, H1), lambda i: (0, 0)),         # b1
            pl.BlockSpec((H1, H2), lambda i: (0, 0)),        # W2
            pl.BlockSpec((1, H2), lambda i: (0, 0)),         # b2
            pl.BlockSpec((1, H2), lambda i: (0, 0)),         # W3 as (1, 512) row
            pl.BlockSpec((1, OUT), lambda i: (0, 0)),        # b3
        ],
        out_specs=(
            pl.BlockSpec((TB, OUT), lambda i: (i, 0)),
            pl.BlockSpec((TB, H2), lambda i: (i, 0)),
        ),
        compiler_params=pltpu.CompilerParams(
            dimension_semantics=("parallel",)),
        cost_estimate=cost,
    )(x, w1, b1, w2, b2, w3_row, b3)

    return out[:B], link[:B]


def init_params(key, embedding_dim):
    """PyTorch-style init for mlp_layers_dim = [2E, 1024, 512, 1] ('cat').

    Weights stored [in, out] (transposed vs torch's [out, in]) so kernels do
    x @ W.  W1 is zero-padded along its input rows to round_up(2E, 128) so the
    layer-1 contraction is a single K=128-aligned MXU pass; W1/W2 are bf16
    (MXU-native), biases f32.  W3 is kept as an f32 (1, 512) row for the
    VPU/XLU final reduction."""
    dims = [2 * embedding_dim, 1024, 512, 1]
    raw = []
    for i in range(len(dims) - 1):
        fan_in, fan_out = dims[i], dims[i + 1]
        key, kw, kb = jax.random.split(key, 3)
        bound = 1.0 / (fan_in ** 0.5)
        w = jax.random.uniform(kw, (fan_in, fan_out), jnp.float32,
                               minval=-bound, maxval=bound)
        b = jax.random.uniform(kb, (1, fan_out), jnp.float32,
                               minval=-bound, maxval=bound)
        raw += [w, b]
    w1, b1, w2, b2, w3, b3 = raw
    Kp = _round_up(2 * embedding_dim, 128)
    if Kp != 2 * embedding_dim:
        w1 = jnp.pad(w1, ((0, Kp - 2 * embedding_dim), (0, 0)))
    return (w1.astype(jnp.bfloat16), b1, w2.astype(jnp.bfloat16), b2,
            w3.T, b3)


if __name__ == "__main__":
    key = jax.random.PRNGKey(0)

    embedding_dim = 32          # small shapes; MLP dims [64, 1024, 512, 1]
    n_drugs, n_targets = 16, 16
    batch = 8

    k1, k2, k3, k4, k5 = jax.random.split(key, 5)
    drug_embedding = jax.random.normal(k1, (n_drugs, embedding_dim),
                                       jnp.float32)
    target_embedding = jax.random.normal(k2, (n_targets, embedding_dim),
                                         jnp.float32)
    drug_id = jax.random.randint(k3, (batch,), 0, n_drugs, jnp.int32)
    target_id = jax.random.randint(k4, (batch,), 0, n_targets, jnp.int32)

    params = init_params(k5, embedding_dim)

    out, link_embeddings = predictor_forward(
        drug_id, target_id, drug_embedding, target_embedding, params)
    jax.block_until_ready((out, link_embeddings))

    # Pure-JAX reference mirroring the kernel's bf16-weight / f32-accumulate
    # numerics (eval-mode dropout = identity).
    w1, b1, w2, b2, w3_row, b3 = params
    d = drug_embedding[drug_id]
    t = target_embedding[target_id]
    x = jnp.concatenate([d, t], axis=-1).astype(jnp.bfloat16)
    x = jnp.pad(x, ((0, 0), (0, w1.shape[0] - x.shape[1])))
    h1 = jnp.maximum(
        jnp.dot(x, w1, preferred_element_type=jnp.float32) + b1, 0.0)
    h2 = jnp.maximum(
        jnp.dot(h1.astype(jnp.bfloat16), w2,
                preferred_element_type=jnp.float32) + b2, 0.0)
    ref_out = jnp.sum(h2 * w3_row, axis=-1, keepdims=True) + b3

    assert out.shape == (batch, 1) and link_embeddings.shape == (batch, 512)
    assert jnp.allclose(out, ref_out, atol=1e-2, rtol=1e-2)
    assert jnp.allclose(link_embeddings, h2, atol=1e-2, rtol=1e-2)

    print("KERNEL_OK")
</pallas_src>

<mosaic_0001>
module attributes {stable_mosaic.version = 11 : i64} {
  func.func @_mlp_kernel(%arg0: i32, %arg1: memref<8x128xbf16, #tpu.memory_space<vmem>>, %arg2: memref<128x1024xbf16, #tpu.memory_space<vmem>>, %arg3: memref<1x1024xf32, #tpu.memory_space<vmem>>, %arg4: memref<1024x512xbf16, #tpu.memory_space<vmem>>, %arg5: memref<1x512xf32, #tpu.memory_space<vmem>>, %arg6: memref<1x512xf32, #tpu.memory_space<vmem>>, %arg7: memref<1x1xf32, #tpu.memory_space<vmem>>, %arg8: memref<8x1xf32, #tpu.memory_space<vmem>>, %arg9: memref<8x512xf32, #tpu.memory_space<vmem>>) attributes {dimension_semantics = [#tpu.dimension_semantics<parallel>], iteration_bounds = array<i64: 1>, scalar_prefetch = 0 : i64, scratch_operands = 0 : i64, tpu.core_type = #tpu.core_type<tc>, window_params = [{transform_indices = @transform_0, window_bounds = array<i64: 8, 128>}, {pipeline_mode = #tpu.pipeline_mode<synchronous>, transform_indices = @transform_1, window_bounds = array<i64: 128, 1024>}, {pipeline_mode = #tpu.pipeline_mode<synchronous>, transform_indices = @transform_2, window_bounds = array<i64: 1, 1024>}, {pipeline_mode = #tpu.pipeline_mode<synchronous>, transform_indices = @transform_3, window_bounds = array<i64: 1024, 512>}, {pipeline_mode = #tpu.pipeline_mode<synchronous>, transform_indices = @transform_4, window_bounds = array<i64: 1, 512>}, {pipeline_mode = #tpu.pipeline_mode<synchronous>, transform_indices = @transform_5, window_bounds = array<i64: 1, 512>}, {pipeline_mode = #tpu.pipeline_mode<synchronous>, transform_indices = @transform_6, window_bounds = array<i64: 1, 1>}, {transform_indices = @transform_7, window_bounds = array<i64: 8, 1>}, {transform_indices = @transform_8, window_bounds = array<i64: 8, 512>}]} {
    %c0 = arith.constant 0 : index
    %c0_0 = arith.constant 0 : index
    %0 = vector.load %arg1[%c0, %c0_0] : memref<8x128xbf16, #tpu.memory_space<vmem>>, vector<8x128xbf16>
    %c0_1 = arith.constant 0 : index
    %c0_2 = arith.constant 0 : index
    %1 = vector.load %arg2[%c0_1, %c0_2] : memref<128x1024xbf16, #tpu.memory_space<vmem>>, vector<128x1024xbf16>
    %cst = arith.constant dense<0.000000e+00> : vector<8x1024xf32>
    %2 = tpu.matmul %0, %1, %cst {dimension_numbers = #tpu.dot_dimension_numbers<[1], [0], [0], [1], [0, 0, 1, 1], [], []>} : vector<8x128xbf16>, vector<128x1024xbf16>, vector<8x1024xf32> -> vector<8x1024xf32>
    %c0_3 = arith.constant 0 : index
    %c0_4 = arith.constant 0 : index
    %3 = vector.load %arg3[%c0_3, %c0_4] : memref<1x1024xf32, #tpu.memory_space<vmem>>, vector<1x1024xf32>
    %4 = vector.broadcast %3 : vector<1x1024xf32> to vector<8x1024xf32>
    %5 = arith.addf %2, %4 : vector<8x1024xf32>
    %cst_5 = arith.constant 0.000000e+00 : f32
    %6 = vector.broadcast %cst_5 : f32 to vector<8x1024xf32>
    %7 = arith.maximumf %5, %6 : vector<8x1024xf32>
    %8 = arith.truncf %7 : vector<8x1024xf32> to vector<8x1024xbf16>
    %c0_6 = arith.constant 0 : index
    %c0_7 = arith.constant 0 : index
    %9 = vector.load %arg4[%c0_6, %c0_7] : memref<1024x512xbf16, #tpu.memory_space<vmem>>, vector<1024x512xbf16>
    %cst_8 = arith.constant dense<0.000000e+00> : vector<8x512xf32>
    %10 = tpu.matmul %8, %9, %cst_8 {dimension_numbers = #tpu.dot_dimension_numbers<[1], [0], [0], [1], [0, 0, 1, 1], [], []>} : vector<8x1024xbf16>, vector<1024x512xbf16>, vector<8x512xf32> -> vector<8x512xf32>
    %c0_9 = arith.constant 0 : index
    %c0_10 = arith.constant 0 : index
    %11 = vector.load %arg5[%c0_9, %c0_10] : memref<1x512xf32, #tpu.memory_space<vmem>>, vector<1x512xf32>
    %12 = vector.broadcast %11 : vector<1x512xf32> to vector<8x512xf32>
    %13 = arith.addf %10, %12 : vector<8x512xf32>
    %cst_11 = arith.constant 0.000000e+00 : f32
    %14 = vector.broadcast %cst_11 : f32 to vector<8x512xf32>
    %15 = arith.maximumf %13, %14 : vector<8x512xf32>
    %c0_12 = arith.constant 0 : index
    %c0_13 = arith.constant 0 : index
    %16 = vector.load %arg9[%c0_12, %c0_13] : memref<8x512xf32, #tpu.memory_space<vmem>>, vector<8x512xf32>
    tpu.vector_store %arg9[%c0_12, %c0_13], %15 {strides = array<i32>} : memref<8x512xf32, #tpu.memory_space<vmem>>, vector<8x512xf32>,
    %c0_14 = arith.constant 0 : index
    %c0_15 = arith.constant 0 : index
    %17 = vector.load %arg6[%c0_14, %c0_15] : memref<1x512xf32, #tpu.memory_space<vmem>>, vector<1x512xf32>
    %18 = vector.broadcast %17 : vector<1x512xf32> to vector<8x512xf32>
    %19 = arith.mulf %15, %18 : vector<8x512xf32>
    %20 = vector.extract_strided_slice %19 {offsets = [0, 0], sizes = [8, 128], strides = [1, 1]} : vector<8x512xf32> to vector<8x128xf32>
    %21 = vector.extract_strided_slice %19 {offsets = [0, 128], sizes = [8, 128], strides = [1, 1]} : vector<8x512xf32> to vector<8x128xf32>
    %22 = arith.addf %20, %21 : vector<8x128xf32>
    %23 = vector.extract_strided_slice %19 {offsets = [0, 256], sizes = [8, 128], strides = [1, 1]} : vector<8x512xf32> to vector<8x128xf32>
    %24 = arith.addf %22, %23 : vector<8x128xf32>
    %25 = vector.extract_strided_slice %19 {offsets = [0, 384], sizes = [8, 128], strides = [1, 1]} : vector<8x512xf32> to vector<8x128xf32>
    %26 = arith.addf %24, %25 : vector<8x128xf32>
    %cst_16 = arith.constant dense<0.000000e+00> : vector<8xf32>
    %27 = vector.multi_reduction <add>, %26, %cst_16 [1] : vector<8x128xf32> to vector<8xf32>
    %28 = vector.shape_cast %27 : vector<8xf32> to vector<8x1xf32>
    %c0_17 = arith.constant 0 : index
    %c0_18 = arith.constant 0 : index
    %29 = vector.load %arg7[%c0_17, %c0_18] : memref<1x1xf32, #tpu.memory_space<vmem>>, vector<1x1xf32>
    %30 = vector.broadcast %29 : vector<1x1xf32> to vector<8x1xf32>
    %31 = arith.addf %28, %30 : vector<8x1xf32>
    %c0_19 = arith.constant 0 : index
    %c0_20 = arith.constant 0 : index
    %32 = vector.load %arg8[%c0_19, %c0_20] : memref<8x1xf32, #tpu.memory_space<vmem>>, vector<8x1xf32>
    tpu.vector_store %arg8[%c0_19, %c0_20], %31 {strides = array<i32>} : memref<8x1xf32, #tpu.memory_space<vmem>>, vector<8x1xf32>,
    return
  }
  func.func @transform_0(%arg0: i32) -> (i32, i32) {
    %c0_i32 = arith.constant 0 : i32
    %c0_i32_0 = arith.constant 0 : i32
    return %arg0, %c0_i32 : i32, i32
  }
  func.func @transform_1(%arg0: i32) -> (i32, i32) {
    %c0_i32 = arith.constant 0 : i32
    %c0_i32_0 = arith.constant 0 : i32
    %c0_i32_1 = arith.constant 0 : i32
    return %c0_i32, %c0_i32_0 : i32, i32
  }
  func.func @transform_2(%arg0: i32) -> (i32, i32) {
    %c0_i32 = arith.constant 0 : i32
    %c0_i32_0 = arith.constant 0 : i32
    %c0_i32_1 = arith.constant 0 : i32
    return %c0_i32, %c0_i32_0 : i32, i32
  }
  func.func @transform_3(%arg0: i32) -> (i32, i32) {
    %c0_i32 = arith.constant 0 : i32
    %c0_i32_0 = arith.constant 0 : i32
    %c0_i32_1 = arith.constant 0 : i32
    return %c0_i32, %c0_i32_0 : i32, i32
  }
  func.func @transform_4(%arg0: i32) -> (i32, i32) {
    %c0_i32 = arith.constant 0 : i32
    %c0_i32_0 = arith.constant 0 : i32
    %c0_i32_1 = arith.constant 0 : i32
    return %c0_i32, %c0_i32_0 : i32, i32
  }
  func.func @transform_5(%arg0: i32) -> (i32, i32) {
    %c0_i32 = arith.constant 0 : i32
    %c0_i32_0 = arith.constant 0 : i32
    %c0_i32_1 = arith.constant 0 : i32
    return %c0_i32, %c0_i32_0 : i32, i32
  }
  func.func @transform_6(%arg0: i32) -> (i32, i32) {
    %c0_i32 = arith.constant 0 : i32
    %c0_i32_0 = arith.constant 0 : i32
    %c0_i32_1 = arith.constant 0 : i32
    return %c0_i32, %c0_i32_0 : i32, i32
  }
  func.func @transform_7(%arg0: i32) -> (i32, i32) {
    %c0_i32 = arith.constant 0 : i32
    %c0_i32_0 = arith.constant 0 : i32
    return %arg0, %c0_i32 : i32, i32
  }
  func.func @transform_8(%arg0: i32) -> (i32, i32) {
    %c0_i32 = arith.constant 0 : i32
    %c0_i32_0 = arith.constant 0 : i32
    return %arg0, %c0_i32 : i32, i32
  }
}

</mosaic_0001>

<llo_original>
// kernel: predictor_forward.1
$region0: #{predictor_forward.1}
  #allocation0 [shape = 'u32[]', space=smem, size = 0x4, offset = 0x4, fixed_abs, tag = 'smem constant byte address 0x4 - core index']
  #allocation1 [shape = 'u32[72,128]{1,0:T(1,128)}', space=vmem, size = 0x9000, scoped, tag = 'internal scratch']
  #allocation2 [shape = 'f32[1,1]{1,0:T(1,128)S(1)}', space=vmem, size = 0x200, scoped, tag = 'scoped memory for predictor_forward.1']
  %s0 = inlined_call_operand.vmem [shape: bf16[8,128], index: 0, kind: input, shape index: {}]
  %s1 = inlined_call_operand.hbm [shape: bf16[128,1024], index: 1, kind: input, shape index: {}]
  %s2 = inlined_call_operand.vmem [shape: f32[1,1024], index: 2, kind: input, shape index: {}]
  %s3 = inlined_call_operand.hbm [shape: bf16[1024,512], index: 3, kind: input, shape index: {}]
  %s4 = inlined_call_operand.vmem [shape: f32[1,512], index: 4, kind: input, shape index: {}]
  %s5 = inlined_call_operand.vmem [shape: f32[1,512], index: 5, kind: input, shape index: {}]
  %s6 = inlined_call_operand.<no memory space> [shape: f32[1,1], index: 6, kind: input, shape index: {}]
  %s7 = inlined_call_operand.vmem [shape: f32[8,1], index: 7, kind: output, shape index: {0}]
  %s8 = inlined_call_operand.hbm [shape: f32[8,512], index: 8, kind: output, shape index: {1}]
  %9 = xla_tuple %s7, %s8
  %s10 = sld [smem:[#allocation0]]
  $region54: #{predictor_forward.1} parent=0
    _
  %s12 = ssub.s32 1, %s10
  %s13 = scalar_select 0, %s12, %s10
  %v14 = vstv %s6
  %15 = vst [vmem:[#allocation2] sm:$0x1] %v14
  $region1: #{predictor_forward.1} parent=0
    #allocation3 [shape = 'u8[262144]{0}', space=vmem, size = 0x40000, scoped, tag = 'input window, operand 1, single buffered']
    #allocation4 [shape = 's32[1]{0}', space=sflag, size = 0x4, scoped, tag = 'scoped memory for predictor_forward.1']
    #allocation5 [shape = 's32[1]{0}', space=sflag, size = 0x4, scoped, tag = 'scoped memory for predictor_forward.1']
    #allocation6 [shape = 'u8[1048576]{0}', space=vmem, size = 0x100000, scoped, tag = 'input window, operand 3, single buffered']
    #allocation7 [shape = 's32[1]{0}', space=sflag, size = 0x4, scoped, tag = 'scoped memory for predictor_forward.1']
    #allocation8 [shape = 'u8[16384]{0}', space=vmem, size = 0x4000, scoped, tag = 'output window, operand 1, single buffered']
    %16 = vsyncpa [#allocation4], 0
    %17 = vsyncpa [#allocation7], 0
    %18 = vsyncpa [#allocation5], 0
    // Predicated region
    $region2: #{predictor_forward.1} parent=1 // pred_check
      _
    $region3: #{predictor_forward.1} parent=1 // pred_check_branch
      %20 = sbr.rel (0) target = $region5
    $region4: #{predictor_forward.1} parent=1 // pred_region
      _
    $region5: #{predictor_forward.1} parent=1 // pred_fallthru
      _
    // Predicated region
    $region6: #{predictor_forward.1} parent=1 // pred_check
      _
    $region7: #{predictor_forward.1} parent=1 // pred_check_branch
      %22 = sbr.rel (0) target = $region9
    $region8: #{predictor_forward.1} parent=1 // pred_region
      %24 = vsyncadd [#allocation4], 0
      %s25 = sshll.u32 %s1, 4
      %s26 = int_to_ptr.hbm [resolvable:$true] %s25
      %s27 = sshll.u32 [#allocation3], 4
      %s28 = int_to_ptr.vmem [resolvable:$true] %s27
      %33 = dma.hbm_to_vmem [thread:$0]  %s26, 8192, %s28, [#allocation4], 512, 512, 32
    $region9: #{predictor_forward.1} parent=1 // pred_fallthru
      _
    // Predicated region
    $region10: #{predictor_forward.1} parent=1 // pred_check
      _
    $region11: #{predictor_forward.1} parent=1 // pred_check_branch
      %35 = sbr.rel (0) target = $region13
    $region12: #{predictor_forward.1} parent=1 // pred_region
      _
    $region13: #{predictor_forward.1} parent=1 // pred_fallthru
      _
    // Predicated region
    $region14: #{predictor_forward.1} parent=1 // pred_check
      _
    $region15: #{predictor_forward.1} parent=1 // pred_check_branch
      %37 = sbr.rel (0) target = $region17
    $region16: #{predictor_forward.1} parent=1 // pred_region
      %39 = vsyncadd [#allocation7], 0
      %s40 = sshll.u32 %s3, 4
      %s41 = int_to_ptr.hbm [resolvable:$true] %s40
      %s42 = sshll.u32 [#allocation6], 4
      %s43 = int_to_ptr.vmem [resolvable:$true] %s42
      %48 = dma.hbm_to_vmem [thread:$0]  %s41, 32768, %s43, [#allocation7], 256, 256, 16
    $region17: #{predictor_forward.1} parent=1 // pred_fallthru
      _
    // Predicated region
    $region18: #{predictor_forward.1} parent=1 // pred_check
      _
    $region19: #{predictor_forward.1} parent=1 // pred_check_branch
      %50 = sbr.rel (0) target = $region21
    $region20: #{predictor_forward.1} parent=1 // pred_region
      _
    $region21: #{predictor_forward.1} parent=1 // pred_fallthru
      _
    // Predicated region
    $region22: #{predictor_forward.1} parent=1 // pred_check
      _
    $region23: #{predictor_forward.1} parent=1 // pred_check_branch
      %52 = sbr.rel (0) target = $region25
    $region24: #{predictor_forward.1} parent=1 // pred_region
      _
    $region25: #{predictor_forward.1} parent=1 // pred_fallthru
      _
    // Predicated region
    $region26: #{predictor_forward.1} parent=1 // pred_check
      _
    $region27: #{predictor_forward.1} parent=1 // pred_check_branch
      %54 = sbr.rel (0) target = $region29
    $region28: #{predictor_forward.1} parent=1 // pred_region
      _
    $region29: #{predictor_forward.1} parent=1 // pred_fallthru
      _
    // Predicated region
    $region30: #{predictor_forward.1} parent=1 // pred_check
      _
    $region31: #{predictor_forward.1} parent=1 // pred_check_branch
      %56 = sbr.rel (0) target = $region33
    $region32: #{predictor_forward.1} parent=1 // pred_region
      %58 = dma.done [#allocation4], 8192
    $region33: #{predictor_forward.1} parent=1 // pred_fallthru
      _
    // Predicated region
    $region34: #{predictor_forward.1} parent=1 // pred_check
      _
    $region35: #{predictor_forward.1} parent=1 // pred_check_branch
      %60 = sbr.rel (0) target = $region37
    $region36: #{predictor_forward.1} parent=1 // pred_region
      %62 = dma.done [#allocation7], 32768
    $region37: #{predictor_forward.1} parent=1 // pred_fallthru
      _
    %v63 = vld [vmem:[%s0] sm:$0xf]
    %v64 = vld [vmem:[#allocation3] sm:$0xff]
    %v65 = vld [vmem:[#allocation3 + $0x8] sm:$0xff]
    %v66 = vld [vmem:[#allocation3 + $0x10] sm:$0xff]
    %v67 = vld [vmem:[#allocation3 + $0x18] sm:$0xff]
    %v68 = vld [vmem:[#allocation3 + $0x20] sm:$0xff]
    %v69 = vld [vmem:[#allocation3 + $0x28] sm:$0xff]
    %v70 = vld [vmem:[#allocation3 + $0x30] sm:$0xff]
    %v71 = vld [vmem:[#allocation3 + $0x38] sm:$0xff]
    %v72 = vld [vmem:[#allocation3 + $0x40] sm:$0xff]
    %v73 = vld [vmem:[#allocation3 + $0x48] sm:$0xff]
    %v74 = vld [vmem:[#allocation3 + $0x50] sm:$0xff]
    %v75 = vld [vmem:[#allocation3 + $0x58] sm:$0xff]
    %v76 = vld [vmem:[#allocation3 + $0x60] sm:$0xff]
    %v77 = vld [vmem:[#allocation3 + $0x68] sm:$0xff]
    %v78 = vld [vmem:[#allocation3 + $0x70] sm:$0xff]
    %v79 = vld [vmem:[#allocation3 + $0x78] sm:$0xff]
    %v80 = vld [vmem:[#allocation3 + $0x80] sm:$0xff]
    %v81 = vld [vmem:[#allocation3 + $0x88] sm:$0xff]
    %v82 = vld [vmem:[#allocation3 + $0x90] sm:$0xff]
    %v83 = vld [vmem:[#allocation3 + $0x98] sm:$0xff]
    %v84 = vld [vmem:[#allocation3 + $0xa0] sm:$0xff]
    %v85 = vld [vmem:[#allocation3 + $0xa8] sm:$0xff]
    %v86 = vld [vmem:[#allocation3 + $0xb0] sm:$0xff]
    %v87 = vld [vmem:[#allocation3 + $0xb8] sm:$0xff]
    %v88 = vld [vmem:[#allocation3 + $0xc0] sm:$0xff]
    %v89 = vld [vmem:[#allocation3 + $0xc8] sm:$0xff]
    %v90 = vld [vmem:[#allocation3 + $0xd0] sm:$0xff]
    %v91 = vld [vmem:[#allocation3 + $0xd8] sm:$0xff]
    %v92 = vld [vmem:[#allocation3 + $0xe0] sm:$0xff]
    %v93 = vld [vmem:[#allocation3 + $0xe8] sm:$0xff]
    %v94 = vld [vmem:[#allocation3 + $0xf0] sm:$0xff]
    %v95 = vld [vmem:[#allocation3 + $0xf8] sm:$0xff]
    %v96 = vld [vmem:[#allocation3 + $0x100] sm:$0xff]
    %v97 = vld [vmem:[#allocation3 + $0x108] sm:$0xff]
    %v98 = vld [vmem:[#allocation3 + $0x110] sm:$0xff]
    %v99 = vld [vmem:[#allocation3 + $0x118] sm:$0xff]
    %v100 = vld [vmem:[#allocation3 + $0x120] sm:$0xff]
    %v101 = vld [vmem:[#allocation3 + $0x128] sm:$0xff]
    %v102 = vld [vmem:[#allocation3 + $0x130] sm:$0xff]
    %v103 = vld [vmem:[#allocation3 + $0x138] sm:$0xff]
    %v104 = vld [vmem:[#allocation3 + $0x140] sm:$0xff]
    %v105 = vld [vmem:[#allocation3 + $0x148] sm:$0xff]
    %v106 = vld [vmem:[#allocation3 + $0x150] sm:$0xff]
    %v107 = vld [vmem:[#allocation3 + $0x158] sm:$0xff]
    %v108 = vld [vmem:[#allocation3 + $0x160] sm:$0xff]
    %v109 = vld [vmem:[#allocation3 + $0x168] sm:$0xff]
    %v110 = vld [vmem:[#allocation3 + $0x170] sm:$0xff]
    %v111 = vld [vmem:[#allocation3 + $0x178] sm:$0xff]
    %v112 = vld [vmem:[#allocation3 + $0x180] sm:$0xff]
    %v113 = vld [vmem:[#allocation3 + $0x188] sm:$0xff]
    %v114 = vld [vmem:[#allocation3 + $0x190] sm:$0xff]
    %v115 = vld [vmem:[#allocation3 + $0x198] sm:$0xff]
    %v116 = vld [vmem:[#allocation3 + $0x1a0] sm:$0xff]
    %v117 = vld [vmem:[#allocation3 + $0x1a8] sm:$0xff]
    %v118 = vld [vmem:[#allocation3 + $0x1b0] sm:$0xff]
    %v119 = vld [vmem:[#allocation3 + $0x1b8] sm:$0xff]
    %v120 = vld [vmem:[#allocation3 + $0x1c0] sm:$0xff]
    %v121 = vld [vmem:[#allocation3 + $0x1c8] sm:$0xff]
    %v122 = vld [vmem:[#allocation3 + $0x1d0] sm:$0xff]
    %v123 = vld [vmem:[#allocation3 + $0x1d8] sm:$0xff]
    %v124 = vld [vmem:[#allocation3 + $0x1e0] sm:$0xff]
    %v125 = vld [vmem:[#allocation3 + $0x1e8] sm:$0xff]
    %v126 = vld [vmem:[#allocation3 + $0x1f0] sm:$0xff]
    %v127 = vld [vmem:[#allocation3 + $0x1f8] sm:$0xff]
    %v128 = vld [vmem:[%s2] sm:$0xff]
    %v130 = vperm.slane %v128, 0
    %v131 = vperm.slane %v128, 1
    %v132 = vperm.slane %v128, 2
    %v133 = vperm.slane %v128, 3
    %v134 = vperm.slane %v128, 4
    %v135 = vperm.slane %v128, 5
    %v136 = vperm.slane %v128, 6
    %v137 = vperm.slane %v128, 7
    %v210 = vunpack.c.l.b16 %v64
    %v211 = vunpack.c.h.b16 %v64
    %v212 = vunpack.c.l.b16 %v65
    %v213 = vunpack.c.h.b16 %v65
    %v214 = vunpack.c.l.b16 %v66
    %v215 = vunpack.c.h.b16 %v66
    %v216 = vunpack.c.l.b16 %v67
    %v217 = vunpack.c.h.b16 %v67
    %v218 = vunpack.c.l.b16 %v68
    %v219 = vunpack.c.h.b16 %v68
    %v220 = vunpack.c.l.b16 %v69
    %v221 = vunpack.c.h.b16 %v69
    %v222 = vunpack.c.l.b16 %v70
    %v223 = vunpack.c.h.b16 %v70
    %v224 = vunpack.c.l.b16 %v71
    %v225 = vunpack.c.h.b16 %v71
    %v226 = vunpack.c.l.b16 %v72
    %v227 = vunpack.c.h.b16 %v72
    %v228 = vunpack.c.l.b16 %v73
    %v229 = vunpack.c.h.b16 %v73
    %v230 = vunpack.c.l.b16 %v74
    %v231 = vunpack.c.h.b16 %v74
    %v232 = vunpack.c.l.b16 %v75
    %v233 = vunpack.c.h.b16 %v75
    %v234 = vunpack.c.l.b16 %v76
    %v235 = vunpack.c.h.b16 %v76
    %v236 = vunpack.c.l.b16 %v77
    %v237 = vunpack.c.h.b16 %v77
    %v238 = vunpack.c.l.b16 %v78
    %v239 = vunpack.c.h.b16 %v78
    %v240 = vunpack.c.l.b16 %v79
    %v241 = vunpack.c.h.b16 %v79
    %v242 = vunpack.c.l.b16 %v80
    %v243 = vunpack.c.h.b16 %v80
    %v244 = vunpack.c.l.b16 %v81
    %v245 = vunpack.c.h.b16 %v81
    %v246 = vunpack.c.l.b16 %v82
    %v247 = vunpack.c.h.b16 %v82
    %v248 = vunpack.c.l.b16 %v83
    %v249 = vunpack.c.h.b16 %v83
    %v250 = vunpack.c.l.b16 %v84
    %v251 = vunpack.c.h.b16 %v84
    %v252 = vunpack.c.l.b16 %v85
    %v253 = vunpack.c.h.b16 %v85
    %v254 = vunpack.c.l.b16 %v86
    %v255 = vunpack.c.h.b16 %v86
    %v256 = vunpack.c.l.b16 %v87
    %v257 = vunpack.c.h.b16 %v87
    %v258 = vunpack.c.l.b16 %v88
    %v259 = vunpack.c.h.b16 %v88
    %v260 = vunpack.c.l.b16 %v89
    %v261 = vunpack.c.h.b16 %v89
    %v262 = vunpack.c.l.b16 %v90
    %v263 = vunpack.c.h.b16 %v90
    %v264 = vunpack.c.l.b16 %v91
    %v265 = vunpack.c.h.b16 %v91
    %v266 = vunpack.c.l.b16 %v92
    %v267 = vunpack.c.h.b16 %v92
    %v268 = vunpack.c.l.b16 %v93
    %v269 = vunpack.c.h.b16 %v93
    %v270 = vunpack.c.l.b16 %v94
    %v271 = vunpack.c.h.b16 %v94
    %v272 = vunpack.c.l.b16 %v95
    %v273 = vunpack.c.h.b16 %v95
    %v274 = vunpack.c.l.b16 %v96
    %v275 = vunpack.c.h.b16 %v96
    %v276 = vunpack.c.l.b16 %v97
    %v277 = vunpack.c.h.b16 %v97
    %v278 = vunpack.c.l.b16 %v98
    %v279 = vunpack.c.h.b16 %v98
    %v280 = vunpack.c.l.b16 %v99
    %v281 = vunpack.c.h.b16 %v99
    %v282 = vunpack.c.l.b16 %v100
    %v283 = vunpack.c.h.b16 %v100
    %v284 = vunpack.c.l.b16 %v101
    %v285 = vunpack.c.h.b16 %v101
    %v286 = vunpack.c.l.b16 %v102
    %v287 = vunpack.c.h.b16 %v102
    %v288 = vunpack.c.l.b16 %v103
    %v289 = vunpack.c.h.b16 %v103
    %v290 = vunpack.c.l.b16 %v104
    %v291 = vunpack.c.h.b16 %v104
    %v292 = vunpack.c.l.b16 %v105
    %v293 = vunpack.c.h.b16 %v105
    %v294 = vunpack.c.l.b16 %v106
    %v295 = vunpack.c.h.b16 %v106
    %v296 = vunpack.c.l.b16 %v107
    %v297 = vunpack.c.h.b16 %v107
    %v298 = vunpack.c.l.b16 %v108
    %v299 = vunpack.c.h.b16 %v108
    %v300 = vunpack.c.l.b16 %v109
    %v301 = vunpack.c.h.b16 %v109
    %v302 = vunpack.c.l.b16 %v110
    %v303 = vunpack.c.h.b16 %v110
    %v304 = vunpack.c.l.b16 %v111
    %v305 = vunpack.c.h.b16 %v111
    %v306 = vunpack.c.l.b16 %v112
    %v307 = vunpack.c.h.b16 %v112
    %v308 = vunpack.c.l.b16 %v113
    %v309 = vunpack.c.h.b16 %v113
    %v310 = vunpack.c.l.b16 %v114
    %v311 = vunpack.c.h.b16 %v114
    %v312 = vunpack.c.l.b16 %v115
    %v313 = vunpack.c.h.b16 %v115
    %v314 = vunpack.c.l.b16 %v116
    %v315 = vunpack.c.h.b16 %v116
    %v316 = vunpack.c.l.b16 %v117
    %v317 = vunpack.c.h.b16 %v117
    %v318 = vunpack.c.l.b16 %v118
    %v319 = vunpack.c.h.b16 %v118
    %v320 = vunpack.c.l.b16 %v119
    %v321 = vunpack.c.h.b16 %v119
    %v322 = vunpack.c.l.b16 %v120
    %v323 = vunpack.c.h.b16 %v120
    %v324 = vunpack.c.l.b16 %v121
    %v325 = vunpack.c.h.b16 %v121
    %v326 = vunpack.c.l.b16 %v122
    %v327 = vunpack.c.h.b16 %v122
    %v328 = vunpack.c.l.b16 %v123
    %v329 = vunpack.c.h.b16 %v123
    %v330 = vunpack.c.l.b16 %v124
    %v331 = vunpack.c.h.b16 %v124
    %v332 = vunpack.c.l.b16 %v125
    %v333 = vunpack.c.h.b16 %v125
    %v334 = vunpack.c.l.b16 %v126
    %v335 = vunpack.c.h.b16 %v126
    %v336 = vunpack.c.l.b16 %v127
    %v337 = vunpack.c.h.b16 %v127
    %v338 = vpack.c.b16 %v218, %v210
    %v339 = vpack.c.b16 %v219, %v211
    %v340 = vpack.c.b16 %v220, %v212
    %v341 = vpack.c.b16 %v221, %v213
    %v342 = vpack.c.b16 %v222, %v214
    %v343 = vpack.c.b16 %v223, %v215
    %v344 = vpack.c.b16 %v224, %v216
    %v345 = vpack.c.b16 %v225, %v217
    %v346 = vpack.c.b16 %v234, %v226
    %v347 = vpack.c.b16 %v235, %v227
    %v348 = vpack.c.b16 %v236, %v228
    %v349 = vpack.c.b16 %v237, %v229
    %v350 = vpack.c.b16 %v238, %v230
    %v351 = vpack.c.b16 %v239, %v231
    %v352 = vpack.c.b16 %v240, %v232
    %v353 = vpack.c.b16 %v241, %v233
    %v354 = vpack.c.b16 %v250, %v242
    %v355 = vpack.c.b16 %v251, %v243
    %v356 = vpack.c.b16 %v252, %v244
    %v357 = vpack.c.b16 %v253, %v245
    %v358 = vpack.c.b16 %v254, %v246
    %v359 = vpack.c.b16 %v255, %v247
    %v360 = vpack.c.b16 %v256, %v248
    %v361 = vpack.c.b16 %v257, %v249
    %v362 = vpack.c.b16 %v266, %v258
    %v363 = vpack.c.b16 %v267, %v259
    %v364 = vpack.c.b16 %v268, %v260
    %v365 = vpack.c.b16 %v269, %v261
    %v366 = vpack.c.b16 %v270, %v262
    %v367 = vpack.c.b16 %v271, %v263
    %v368 = vpack.c.b16 %v272, %v264
    %v369 = vpack.c.b16 %v273, %v265
    %v370 = vpack.c.b16 %v282, %v274
    %v371 = vpack.c.b16 %v283, %v275
    %v372 = vpack.c.b16 %v284, %v276
    %v373 = vpack.c.b16 %v285, %v277
    %v374 = vpack.c.b16 %v286, %v278
    %v375 = vpack.c.b16 %v287, %v279
    %v376 = vpack.c.b16 %v288, %v280
    %v377 = vpack.c.b16 %v289, %v281
    %v378 = vpack.c.b16 %v298, %v290
    %v379 = vpack.c.b16 %v299, %v291
    %v380 = vpack.c.b16 %v300, %v292
    %v381 = vpack.c.b16 %v301, %v293
    %v382 = vpack.c.b16 %v302, %v294
    %v383 = vpack.c.b16 %v303, %v295
    %v384 = vpack.c.b16 %v304, %v296
    %v385 = vpack.c.b16 %v305, %v297
    %v386 = vpack.c.b16 %v314, %v306
    %v387 = vpack.c.b16 %v315, %v307
    %v388 = vpack.c.b16 %v316, %v308
    %v389 = vpack.c.b16 %v317, %v309
    %v390 = vpack.c.b16 %v318, %v310
    %v391 = vpack.c.b16 %v319, %v311
    %v392 = vpack.c.b16 %v320, %v312
    %v393 = vpack.c.b16 %v321, %v313
    %v394 = vpack.c.b16 %v330, %v322
    %v395 = vpack.c.b16 %v331, %v323
    %v396 = vpack.c.b16 %v332, %v324
    %v397 = vpack.c.b16 %v333, %v325
    %v398 = vpack.c.b16 %v334, %v326
    %v399 = vpack.c.b16 %v335, %v327
    %v400 = vpack.c.b16 %v336, %v328
    %v401 = vpack.c.b16 %v337, %v329
    %466 = vmatpush.bf16.msra.mxu0 %v394
    %467 = vmatpush.bf16.msra.mxu0 %v386
    %468 = vmatpush.bf16.msra.mxu0 %v378
    %469 = vmatpush.bf16.msra.mxu0 %v370
    %470 = vmatpush.bf16.msra.mxu0 %v362
    %471 = vmatpush.bf16.msra.mxu0 %v354
    %472 = vmatpush.bf16.msra.mxu0 %v346
    %473 = vmatpush.bf16.msra.mxu0 %v338
    %474 = vmatmul.bf16.gmra.mxu0 %v63
    %v475 = vpop.f32.mrf.mxu0
    %v476 = vadd.f32 %v130, %v475
    %v477 = vpop.f32.mrf.mxu0
    %478 = vdwg.mxu0
    %479 = vmatpush.bf16.msra.mxu0 %v395
    %480 = vmatpush.bf16.msra.mxu0 %v387
    %481 = vmatpush.bf16.msra.mxu0 %v379
    %482 = vmatpush.bf16.msra.mxu0 %v371
    %483 = vmatpush.bf16.msra.mxu0 %v363
    %484 = vmatpush.bf16.msra.mxu0 %v355
    %485 = vmatpush.bf16.msra.mxu0 %v347
    %486 = vmatpush.bf16.msra.mxu0 %v339
    %487 = vmatmul.bf16.gmra.mxu0 %v63
    %v488 = vpop.f32.mrf.mxu0
    %v489 = vadd.f32 %v131, %v488
    %v490 = vpop.f32.mrf.mxu0
    %491 = vdwg.mxu0
    %492 = vmatpush.bf16.msra.mxu0 %v396
    %493 = vmatpush.bf16.msra.mxu0 %v388
    %494 = vmatpush.bf16.msra.mxu0 %v380
    %495 = vmatpush.bf16.msra.mxu0 %v372
    %496 = vmatpush.bf16.msra.mxu0 %v364
    %497 = vmatpush.bf16.msra.mxu0 %v356
    %498 = vmatpush.bf16.msra.mxu0 %v348
    %499 = vmatpush.bf16.msra.mxu0 %v340
    %500 = vmatmul.bf16.gmra.mxu0 %v63
    %v501 = vpop.f32.mrf.mxu0
    %v502 = vadd.f32 %v132, %v501
    %v503 = vpop.f32.mrf.mxu0
    %504 = vdwg.mxu0
    %505 = vmatpush.bf16.msra.mxu0 %v397
    %506 = vmatpush.bf16.msra.mxu0 %v389
    %507 = vmatpush.bf16.msra.mxu0 %v381
    %508 = vmatpush.bf16.msra.mxu0 %v373
    %509 = vmatpush.bf16.msra.mxu0 %v365
    %510 = vmatpush.bf16.msra.mxu0 %v357
    %511 = vmatpush.bf16.msra.mxu0 %v349
    %512 = vmatpush.bf16.msra.mxu0 %v341
    %513 = vmatmul.bf16.gmra.mxu0 %v63
    %v514 = vpop.f32.mrf.mxu0
    %v515 = vadd.f32 %v133, %v514
    %v516 = vpop.f32.mrf.mxu0
    %517 = vdwg.mxu0
    %518 = vmatpush.bf16.msra.mxu0 %v398
    %519 = vmatpush.bf16.msra.mxu0 %v390
    %520 = vmatpush.bf16.msra.mxu0 %v382
    %521 = vmatpush.bf16.msra.mxu0 %v374
    %522 = vmatpush.bf16.msra.mxu0 %v366
    %523 = vmatpush.bf16.msra.mxu0 %v358
    %524 = vmatpush.bf16.msra.mxu0 %v350
    %525 = vmatpush.bf16.msra.mxu0 %v342
    %526 = vmatmul.bf16.gmra.mxu0 %v63
    %v527 = vpop.f32.mrf.mxu0
    %v528 = vadd.f32 %v134, %v527
    %v529 = vpop.f32.mrf.mxu0
    %530 = vdwg.mxu0
    %531 = vmatpush.bf16.msra.mxu0 %v399
    %532 = vmatpush.bf16.msra.mxu0 %v391
    %533 = vmatpush.bf16.msra.mxu0 %v383
    %534 = vmatpush.bf16.msra.mxu0 %v375
    %535 = vmatpush.bf16.msra.mxu0 %v367
    %536 = vmatpush.bf16.msra.mxu0 %v359
    %537 = vmatpush.bf16.msra.mxu0 %v351
    %538 = vmatpush.bf16.msra.mxu0 %v343
    %539 = vmatmul.bf16.gmra.mxu0 %v63
    %v540 = vpop.f32.mrf.mxu0
    %v541 = vadd.f32 %v135, %v540
    %v542 = vpop.f32.mrf.mxu0
    %543 = vdwg.mxu0
    %544 = vmatpush.bf16.msra.mxu0 %v400
    %545 = vmatpush.bf16.msra.mxu0 %v392
    %546 = vmatpush.bf16.msra.mxu0 %v384
    %547 = vmatpush.bf16.msra.mxu0 %v376
    %548 = vmatpush.bf16.msra.mxu0 %v368
    %549 = vmatpush.bf16.msra.mxu0 %v360
    %550 = vmatpush.bf16.msra.mxu0 %v352
    %551 = vmatpush.bf16.msra.mxu0 %v344
    %552 = vmatmul.bf16.gmra.mxu0 %v63
    %v553 = vpop.f32.mrf.mxu0
    %v554 = vadd.f32 %v136, %v553
    %v555 = vpop.f32.mrf.mxu0
    %556 = vdwg.mxu0
    %557 = vmatpush.bf16.msra.mxu0 %v401
    %558 = vmatpush.bf16.msra.mxu0 %v393
    %559 = vmatpush.bf16.msra.mxu0 %v385
    %560 = vmatpush.bf16.msra.mxu0 %v377
    %561 = vmatpush.bf16.msra.mxu0 %v369
    %562 = vmatpush.bf16.msra.mxu0 %v361
    %563 = vmatpush.bf16.msra.mxu0 %v353
    %564 = vmatpush.bf16.msra.mxu0 %v345
    %565 = vmatmul.bf16.gmra.mxu0 %v63
    %v566 = vpop.f32.mrf.mxu0
    %v567 = vadd.f32 %v137, %v566
    %v568 = vpop.f32.mrf.mxu0
    %569 = vdwg.mxu0
    %v570 = vmax.f32 %v476, 0.0
    %v571 = vmax.f32 %v489, 0.0
    %v572 = vmax.f32 %v502, 0.0
    %v573 = vmax.f32 %v515, 0.0
    %v574 = vmax.f32 %v528, 0.0
    %v575 = vmax.f32 %v541, 0.0
    %v576 = vmax.f32 %v554, 0.0
    %v577 = vmax.f32 %v567, 0.0
    %v578 = vpack.c.bf16 %v570, %v570
    %v579 = vpack.c.bf16 %v571, %v571
    %v580 = vpack.c.bf16 %v572, %v572
    %v581 = vpack.c.bf16 %v573, %v573
    %v582 = vpack.c.bf16 %v574, %v574
    %v583 = vpack.c.bf16 %v575, %v575
    %v584 = vpack.c.bf16 %v576, %v576
    %v585 = vpack.c.bf16 %v577, %v577
    %v586 = vld [vmem:[#allocation6] sm:$0xff]
    %v587 = vld [vmem:[#allocation6 + $0x8] sm:$0xff]
    %v588 = vld [vmem:[#allocation6 + $0x10] sm:$0xff]
    %v589 = vld [vmem:[#allocation6 + $0x18] sm:$0xff]
    %v590 = vld [vmem:[#allocation6 + $0x20] sm:$0xff]
    %v591 = vld [vmem:[#allocation6 + $0x28] sm:$0xff]
    %v592 = vld [vmem:[#allocation6 + $0x30] sm:$0xff]
    %v593 = vld [vmem:[#allocation6 + $0x38] sm:$0xff]
    %v594 = vld [vmem:[#allocation6 + $0x40] sm:$0xff]
    %v595 = vld [vmem:[#allocation6 + $0x48] sm:$0xff]
    %v596 = vld [vmem:[#allocation6 + $0x50] sm:$0xff]
    %v597 = vld [vmem:[#allocation6 + $0x58] sm:$0xff]
    %v598 = vld [vmem:[#allocation6 + $0x60] sm:$0xff]
    %v599 = vld [vmem:[#allocation6 + $0x68] sm:$0xff]
    %v600 = vld [vmem:[#allocation6 + $0x70] sm:$0xff]
    %v601 = vld [vmem:[#allocation6 + $0x78] sm:$0xff]
    %v602 = vld [vmem:[#allocation6 + $0x80] sm:$0xff]
    %v603 = vld [vmem:[#allocation6 + $0x88] sm:$0xff]
    %v604 = vld [vmem:[#allocation6 + $0x90] sm:$0xff]
    %v605 = vld [vmem:[#allocation6 + $0x98] sm:$0xff]
    %v606 = vld [vmem:[#allocation6 + $0xa0] sm:$0xff]
    %v607 = vld [vmem:[#allocation6 + $0xa8] sm:$0xff]
    %v608 = vld [vmem:[#allocation6 + $0xb0] sm:$0xff]
    %v609 = vld [vmem:[#allocation6 + $0xb8] sm:$0xff]
    %v610 = vld [vmem:[#allocation6 + $0xc0] sm:$0xff]
    %v611 = vld [vmem:[#allocation6 + $0xc8] sm:$0xff]
    %v612 = vld [vmem:[#allocation6 + $0xd0] sm:$0xff]
    %v613 = vld [vmem:[#allocation6 + $0xd8] sm:$0xff]
    %v614 = vld [vmem:[#allocation6 + $0xe0] sm:$0xff]
    %v615 = vld [vmem:[#allocation6 + $0xe8] sm:$0xff]
    %v616 = vld [vmem:[#allocation6 + $0xf0] sm:$0xff]
    %v617 = vld [vmem:[#allocation6 + $0xf8] sm:$0xff]
    %v618 = vld [vmem:[#allocation6 + $0x100] sm:$0xff]
    %v619 = vld [vmem:[#allocation6 + $0x108] sm:$0xff]
    %v620 = vld [vmem:[#allocation6 + $0x110] sm:$0xff]
    %v621 = vld [vmem:[#allocation6 + $0x118] sm:$0xff]
    %v622 = vld [vmem:[#allocation6 + $0x120] sm:$0xff]
    %v623 = vld [vmem:[#allocation6 + $0x128] sm:$0xff]
    %v624 = vld [vmem:[#allocation6 + $0x130] sm:$0xff]
    %v625 = vld [vmem:[#allocation6 + $0x138] sm:$0xff]
    %v626 = vld [vmem:[#allocation6 + $0x140] sm:$0xff]
    %v627 = vld [vmem:[#allocation6 + $0x148] sm:$0xff]
    %v628 = vld [vmem:[#allocation6 + $0x150] sm:$0xff]
    %v629 = vld [vmem:[#allocation6 + $0x158] sm:$0xff]
    %v630 = vld [vmem:[#allocation6 + $0x160] sm:$0xff]
    %v631 = vld [vmem:[#allocation6 + $0x168] sm:$0xff]
    %v632 = vld [vmem:[#allocation6 + $0x170] sm:$0xff]
    %v633 = vld [vmem:[#allocation6 + $0x178] sm:$0xff]
    %v634 = vld [vmem:[#allocation6 + $0x180] sm:$0xff]
    %v635 = vld [vmem:[#allocation6 + $0x188] sm:$0xff]
    %v636 = vld [vmem:[#allocation6 + $0x190] sm:$0xff]
    %v637 = vld [vmem:[#allocation6 + $0x198] sm:$0xff]
    %v638 = vld [vmem:[#allocation6 + $0x1a0] sm:$0xff]
    %v639 = vld [vmem:[#allocation6 + $0x1a8] sm:$0xff]
    %v640 = vld [vmem:[#allocation6 + $0x1b0] sm:$0xff]
    %v641 = vld [vmem:[#allocation6 + $0x1b8] sm:$0xff]
    %v642 = vld [vmem:[#allocation6 + $0x1c0] sm:$0xff]
    %v643 = vld [vmem:[#allocation6 + $0x1c8] sm:$0xff]
    %v644 = vld [vmem:[#allocation6 + $0x1d0] sm:$0xff]
    %v645 = vld [vmem:[#allocation6 + $0x1d8] sm:$0xff]
    %v646 = vld [vmem:[#allocation6 + $0x1e0] sm:$0xff]
    %v647 = vld [vmem:[#allocation6 + $0x1e8] sm:$0xff]
    %v648 = vld [vmem:[#allocation6 + $0x1f0] sm:$0xff]
    %v649 = vld [vmem:[#allocation6 + $0x1f8] sm:$0xff]
    %v650 = vld [vmem:[#allocation6 + $0x200] sm:$0xff]
    %v651 = vld [vmem:[#allocation6 + $0x208] sm:$0xff]
    %v652 = vld [vmem:[#allocation6 + $0x210] sm:$0xff]
    %v653 = vld [vmem:[#allocation6 + $0x218] sm:$0xff]
    %v654 = vld [vmem:[#allocation6 + $0x220] sm:$0xff]
    %v655 = vld [vmem:[#allocation6 + $0x228] sm:$0xff]
    %v656 = vld [vmem:[#allocation6 + $0x230] sm:$0xff]
    %v657 = vld [vmem:[#allocation6 + $0x238] sm:$0xff]
    %v658 = vld [vmem:[#allocation6 + $0x240] sm:$0xff]
    %v659 = vld [vmem:[#allocation6 + $0x248] sm:$0xff]
    %v660 = vld [vmem:[#allocation6 + $0x250] sm:$0xff]
    %v661 = vld [vmem:[#allocation6 + $0x258] sm:$0xff]
    %v662 = vld [vmem:[#allocation6 + $0x260] sm:$0xff]
    %v663 = vld [vmem:[#allocation6 + $0x268] sm:$0xff]
    %v664 = vld [vmem:[#allocation6 + $0x270] sm:$0xff]
    %v665 = vld [vmem:[#allocation6 + $0x278] sm:$0xff]
    %v666 = vld [vmem:[#allocation6 + $0x280] sm:$0xff]
    %v667 = vld [vmem:[#allocation6 + $0x288] sm:$0xff]
    %v668 = vld [vmem:[#allocation6 + $0x290] sm:$0xff]
    %v669 = vld [vmem:[#allocation6 + $0x298] sm:$0xff]
    %v670 = vld [vmem:[#allocation6 + $0x2a0] sm:$0xff]
    %v671 = vld [vmem:[#allocation6 + $0x2a8] sm:$0xff]
    %v672 = vld [vmem:[#allocation6 + $0x2b0] sm:$0xff]
    %v673 = vld [vmem:[#allocation6 + $0x2b8] sm:$0xff]
    %v674 = vld [vmem:[#allocation6 + $0x2c0] sm:$0xff]
    %v675 = vld [vmem:[#allocation6 + $0x2c8] sm:$0xff]
    %v676 = vld [vmem:[#allocation6 + $0x2d0] sm:$0xff]
    %v677 = vld [vmem:[#allocation6 + $0x2d8] sm:$0xff]
    %v678 = vld [vmem:[#allocation6 + $0x2e0] sm:$0xff]
    %v679 = vld [vmem:[#allocation6 + $0x2e8] sm:$0xff]
    %v680 = vld [vmem:[#allocation6 + $0x2f0] sm:$0xff]
    %v681 = vld [vmem:[#allocation6 + $0x2f8] sm:$0xff]
    %v682 = vld [vmem:[#allocation6 + $0x300] sm:$0xff]
    %v683 = vld [vmem:[#allocation6 + $0x308] sm:$0xff]
    %v684 = vld [vmem:[#allocation6 + $0x310] sm:$0xff]
    %v685 = vld [vmem:[#allocation6 + $0x318] sm:$0xff]
    %v686 = vld [vmem:[#allocation6 + $0x320] sm:$0xff]
    %v687 = vld [vmem:[#allocation6 + $0x328] sm:$0xff]
    %v688 = vld [vmem:[#allocation6 + $0x330] sm:$0xff]
    %v689 = vld [vmem:[#allocation6 + $0x338] sm:$0xff]
    %v690 = vld [vmem:[#allocation6 + $0x340] sm:$0xff]
    %v691 = vld [vmem:[#allocation6 + $0x348] sm:$0xff]
    %v692 = vld [vmem:[#allocation6 + $0x350] sm:$0xff]
    %v693 = vld [vmem:[#allocation6 + $0x358] sm:$0xff]
    %v694 = vld [vmem:[#allocation6 + $0x360] sm:$0xff]
    %v695 = vld [vmem:[#allocation6 + $0x368] sm:$0xff]
    %v696 = vld [vmem:[#allocation6 + $0x370] sm:$0xff]
    %v697 = vld [vmem:[#allocation6 + $0x378] sm:$0xff]
    %v698 = vld [vmem:[#allocation6 + $0x380] sm:$0xff]
    %v699 = vld [vmem:[#allocation6 + $0x388] sm:$0xff]
    %v700 = vld [vmem:[#allocation6 + $0x390] sm:$0xff]
    %v701 = vld [vmem:[#allocation6 + $0x398] sm:$0xff]
    %v702 = vld [vmem:[#allocation6 + $0x3a0] sm:$0xff]
    %v703 = vld [vmem:[#allocation6 + $0x3a8] sm:$0xff]
    %v704 = vld [vmem:[#allocation6 + $0x3b0] sm:$0xff]
    %v705 = vld [vmem:[#allocation6 + $0x3b8] sm:$0xff]
    %v706 = vld [vmem:[#allocation6 + $0x3c0] sm:$0xff]
    %v707 = vld [vmem:[#allocation6 + $0x3c8] sm:$0xff]
    %v708 = vld [vmem:[#allocation6 + $0x3d0] sm:$0xff]
    %v709 = vld [vmem:[#allocation6 + $0x3d8] sm:$0xff]
    %v710 = vld [vmem:[#allocation6 + $0x3e0] sm:$0xff]
    %v711 = vld [vmem:[#allocation6 + $0x3e8] sm:$0xff]
    %v712 = vld [vmem:[#allocation6 + $0x3f0] sm:$0xff]
    %v713 = vld [vmem:[#allocation6 + $0x3f8] sm:$0xff]
    %v714 = vld [vmem:[#allocation6 + $0x400] sm:$0xff]
    %v715 = vld [vmem:[#allocation6 + $0x408] sm:$0xff]
    %v716 = vld [vmem:[#allocation6 + $0x410] sm:$0xff]
    %v717 = vld [vmem:[#allocation6 + $0x418] sm:$0xff]
    %v718 = vld [vmem:[#allocation6 + $0x420] sm:$0xff]
    %v719 = vld [vmem:[#allocation6 + $0x428] sm:$0xff]
    %v720 = vld [vmem:[#allocation6 + $0x430] sm:$0xff]
    %v721 = vld [vmem:[#allocation6 + $0x438] sm:$0xff]
    %v722 = vld [vmem:[#allocation6 + $0x440] sm:$0xff]
    %v723 = vld [vmem:[#allocation6 + $0x448] sm:$0xff]
    %v724 = vld [vmem:[#allocation6 + $0x450] sm:$0xff]
    %v725 = vld [vmem:[#allocation6 + $0x458] sm:$0xff]
    %v726 = vld [vmem:[#allocation6 + $0x460] sm:$0xff]
    %v727 = vld [vmem:[#allocation6 + $0x468] sm:$0xff]
    %v728 = vld [vmem:[#allocation6 + $0x470] sm:$0xff]
    %v729 = vld [vmem:[#allocation6 + $0x478] sm:$0xff]
    %v730 = vld [vmem:[#allocation6 + $0x480] sm:$0xff]
    %v731 = vld [vmem:[#allocation6 + $0x488] sm:$0xff]
    %v732 = vld [vmem:[#allocation6 + $0x490] sm:$0xff]
    %v733 = vld [vmem:[#allocation6 + $0x498] sm:$0xff]
    %v734 = vld [vmem:[#allocation6 + $0x4a0] sm:$0xff]
    %v735 = vld [vmem:[#allocation6 + $0x4a8] sm:$0xff]
    %v736 = vld [vmem:[#allocation6 + $0x4b0] sm:$0xff]
    %v737 = vld [vmem:[#allocation6 + $0x4b8] sm:$0xff]
    %v738 = vld [vmem:[#allocation6 + $0x4c0] sm:$0xff]
    %v739 = vld [vmem:[#allocation6 + $0x4c8] sm:$0xff]
    %v740 = vld [vmem:[#allocation6 + $0x4d0] sm:$0xff]
    %v741 = vld [vmem:[#allocation6 + $0x4d8] sm:$0xff]
    %v742 = vld [vmem:[#allocation6 + $0x4e0] sm:$0xff]
    %v743 = vld [vmem:[#allocation6 + $0x4e8] sm:$0xff]
    %v744 = vld [vmem:[#allocation6 + $0x4f0] sm:$0xff]
    %v745 = vld [vmem:[#allocation6 + $0x4f8] sm:$0xff]
    %v746 = vld [vmem:[#allocation6 + $0x500] sm:$0xff]
    %v747 = vld [vmem:[#allocation6 + $0x508] sm:$0xff]
    %v748 = vld [vmem:[#allocation6 + $0x510] sm:$0xff]
    %v749 = vld [vmem:[#allocation6 + $0x518] sm:$0xff]
    %v750 = vld [vmem:[#allocation6 + $0x520] sm:$0xff]
    %v751 = vld [vmem:[#allocation6 + $0x528] sm:$0xff]
    %v752 = vld [vmem:[#allocation6 + $0x530] sm:$0xff]
    %v753 = vld [vmem:[#allocation6 + $0x538] sm:$0xff]
    %v754 = vld [vmem:[#allocation6 + $0x540] sm:$0xff]
    %v755 = vld [vmem:[#allocation6 + $0x548] sm:$0xff]
    %v756 = vld [vmem:[#allocation6 + $0x550] sm:$0xff]
    %v757 = vld [vmem:[#allocation6 + $0x558] sm:$0xff]
    %v758 = vld [vmem:[#allocation6 + $0x560] sm:$0xff]
    %v759 = vld [vmem:[#allocation6 + $0x568] sm:$0xff]
    %v760 = vld [vmem:[#allocation6 + $0x570] sm:$0xff]
    %v761 = vld [vmem:[#allocation6 + $0x578] sm:$0xff]
    %v762 = vld [vmem:[#allocation6 + $0x580] sm:$0xff]
    %v763 = vld [vmem:[#allocation6 + $0x588] sm:$0xff]
    %v764 = vld [vmem:[#allocation6 + $0x590] sm:$0xff]
    %v765 = vld [vmem:[#allocation6 + $0x598] sm:$0xff]
    %v766 = vld [vmem:[#allocation6 + $0x5a0] sm:$0xff]
    %v767 = vld [vmem:[#allocation6 + $0x5a8] sm:$0xff]
    %v768 = vld [vmem:[#allocation6 + $0x5b0] sm:$0xff]
    %v769 = vld [vmem:[#allocation6 + $0x5b8] sm:$0xff]
    %v770 = vld [vmem:[#allocation6 + $0x5c0] sm:$0xff]
    %v771 = vld [vmem:[#allocation6 + $0x5c8] sm:$0xff]
    %v772 = vld [vmem:[#allocation6 + $0x5d0] sm:$0xff]
    %v773 = vld [vmem:[#allocation6 + $0x5d8] sm:$0xff]
    %v774 = vld [vmem:[#allocation6 + $0x5e0] sm:$0xff]
    %v775 = vld [vmem:[#allocation6 + $0x5e8] sm:$0xff]
    %v776 = vld [vmem:[#allocation6 + $0x5f0] sm:$0xff]
    %v777 = vld [vmem:[#allocation6 + $0x5f8] sm:$0xff]
    %v778 = vld [vmem:[#allocation6 + $0x600] sm:$0xff]
    %v779 = vld [vmem:[#allocation6 + $0x608] sm:$0xff]
    %v780 = vld [vmem:[#allocation6 + $0x610] sm:$0xff]
    %v781 = vld [vmem:[#allocation6 + $0x618] sm:$0xff]
    %v782 = vld [vmem:[#allocation6 + $0x620] sm:$0xff]
    %v783 = vld [vmem:[#allocation6 + $0x628] sm:$0xff]
    %v784 = vld [vmem:[#allocation6 + $0x630] sm:$0xff]
    %v785 = vld [vmem:[#allocation6 + $0x638] sm:$0xff]
    %v786 = vld [vmem:[#allocation6 + $0x640] sm:$0xff]
    %v787 = vld [vmem:[#allocation6 + $0x648] sm:$0xff]
    %v788 = vld [vmem:[#allocation6 + $0x650] sm:$0xff]
    %v789 = vld [vmem:[#allocation6 + $0x658] sm:$0xff]
    %v790 = vld [vmem:[#allocation6 + $0x660] sm:$0xff]
    %v791 = vld [vmem:[#allocation6 + $0x668] sm:$0xff]
    %v792 = vld [vmem:[#allocation6 + $0x670] sm:$0xff]
    %v793 = vld [vmem:[#allocation6 + $0x678] sm:$0xff]
    %v794 = vld [vmem:[#allocation6 + $0x680] sm:$0xff]
    %v795 = vld [vmem:[#allocation6 + $0x688] sm:$0xff]
    %v796 = vld [vmem:[#allocation6 + $0x690] sm:$0xff]
    %v797 = vld [vmem:[#allocation6 + $0x698] sm:$0xff]
    %v798 = vld [vmem:[#allocation6 + $0x6a0] sm:$0xff]
    %v799 = vld [vmem:[#allocation6 + $0x6a8] sm:$0xff]
    %v800 = vld [vmem:[#allocation6 + $0x6b0] sm:$0xff]
    %v801 = vld [vmem:[#allocation6 + $0x6b8] sm:$0xff]
    %v802 = vld [vmem:[#allocation6 + $0x6c0] sm:$0xff]
    %v803 = vld [vmem:[#allocation6 + $0x6c8] sm:$0xff]
    %v804 = vld [vmem:[#allocation6 + $0x6d0] sm:$0xff]
    %v805 = vld [vmem:[#allocation6 + $0x6d8] sm:$0xff]
    %v806 = vld [vmem:[#allocation6 + $0x6e0] sm:$0xff]
    %v807 = vld [vmem:[#allocation6 + $0x6e8] sm:$0xff]
    %v808 = vld [vmem:[#allocation6 + $0x6f0] sm:$0xff]
    %v809 = vld [vmem:[#allocation6 + $0x6f8] sm:$0xff]
    %v810 = vld [vmem:[#allocation6 + $0x700] sm:$0xff]
    %v811 = vld [vmem:[#allocation6 + $0x708] sm:$0xff]
    %v812 = vld [vmem:[#allocation6 + $0x710] sm:$0xff]
    %v813 = vld [vmem:[#allocation6 + $0x718] sm:$0xff]
    %v814 = vld [vmem:[#allocation6 + $0x720] sm:$0xff]
    %v815 = vld [vmem:[#allocation6 + $0x728] sm:$0xff]
    %v816 = vld [vmem:[#allocation6 + $0x730] sm:$0xff]
    %v817 = vld [vmem:[#allocation6 + $0x738] sm:$0xff]
    %v818 = vld [vmem:[#allocation6 + $0x740] sm:$0xff]
    %v819 = vld [vmem:[#allocation6 + $0x748] sm:$0xff]
    %v820 = vld [vmem:[#allocation6 + $0x750] sm:$0xff]
    %v821 = vld [vmem:[#allocation6 + $0x758] sm:$0xff]
    %v822 = vld [vmem:[#allocation6 + $0x760] sm:$0xff]
    %v823 = vld [vmem:[#allocation6 + $0x768] sm:$0xff]
    %v824 = vld [vmem:[#allocation6 + $0x770] sm:$0xff]
    %v825 = vld [vmem:[#allocation6 + $0x778] sm:$0xff]
    %v826 = vld [vmem:[#allocation6 + $0x780] sm:$0xff]
    %v827 = vld [vmem:[#allocation6 + $0x788] sm:$0xff]
    %v828 = vld [vmem:[#allocation6 + $0x790] sm:$0xff]
    %v829 = vld [vmem:[#allocation6 + $0x798] sm:$0xff]
    %v830 = vld [vmem:[#allocation6 + $0x7a0] sm:$0xff]
    %v831 = vld [vmem:[#allocation6 + $0x7a8] sm:$0xff]
    %v832 = vld [vmem:[#allocation6 + $0x7b0] sm:$0xff]
    %v833 = vld [vmem:[#allocation6 + $0x7b8] sm:$0xff]
    %v834 = vld [vmem:[#allocation6 + $0x7c0] sm:$0xff]
    %v835 = vld [vmem:[#allocation6 + $0x7c8] sm:$0xff]
    %v836 = vld [vmem:[#allocation6 + $0x7d0] sm:$0xff]
    %v837 = vld [vmem:[#allocation6 + $0x7d8] sm:$0xff]
    %v838 = vld [vmem:[#allocation6 + $0x7e0] sm:$0xff]
    %v839 = vld [vmem:[#allocation6 + $0x7e8] sm:$0xff]
    %v840 = vld [vmem:[#allocation6 + $0x7f0] sm:$0xff]
    %v841 = vld [vmem:[#allocation6 + $0x7f8] sm:$0xff]
    %v842 = vld [vmem:[%s4] sm:$0xf]
    %v844 = vperm.slane %v842, 0
    %v845 = vperm.slane %v842, 1
    %v846 = vperm.slane %v842, 2
    %v847 = vperm.slane %v842, 3
    %v1108 = vunpack.c.l.b16 %v586
    %v1109 = vunpack.c.h.b16 %v586
    %v1110 = vunpack.c.l.b16 %v587
    %v1111 = vunpack.c.h.b16 %v587
    %v1112 = vunpack.c.l.b16 %v588
    %v1113 = vunpack.c.h.b16 %v588
    %v1114 = vunpack.c.l.b16 %v589
    %v1115 = vunpack.c.h.b16 %v589
    %v1116 = vunpack.c.l.b16 %v590
    %v1117 = vunpack.c.h.b16 %v590
    %v1118 = vunpack.c.l.b16 %v591
    %v1119 = vunpack.c.h.b16 %v591
    %v1120 = vunpack.c.l.b16 %v592
    %v1121 = vunpack.c.h.b16 %v592
    %v1122 = vunpack.c.l.b16 %v593
    %v1123 = vunpack.c.h.b16 %v593
    %v1124 = vunpack.c.l.b16 %v594
    %v1125 = vunpack.c.h.b16 %v594
    %v1126 = vunpack.c.l.b16 %v595
    %v1127 = vunpack.c.h.b16 %v595
    %v1128 = vunpack.c.l.b16 %v596
    %v1129 = vunpack.c.h.b16 %v596
    %v1130 = vunpack.c.l.b16 %v597
    %v1131 = vunpack.c.h.b16 %v597
    %v1132 = vunpack.c.l.b16 %v598
    %v1133 = vunpack.c.h.b16 %v598
    %v1134 = vunpack.c.l.b16 %v599
    %v1135 = vunpack.c.h.b16 %v599
    %v1136 = vunpack.c.l.b16 %v600
    %v1137 = vunpack.c.h.b16 %v600
    %v1138 = vunpack.c.l.b16 %v601
    %v1139 = vunpack.c.h.b16 %v601
    %v1140 = vunpack.c.l.b16 %v602
    %v1141 = vunpack.c.h.b16 %v602
    %v1142 = vunpack.c.l.b16 %v603
    %v1143 = vunpack.c.h.b16 %v603
    %v1144 = vunpack.c.l.b16 %v604
    %v1145 = vunpack.c.h.b16 %v604
    %v1146 = vunpack.c.l.b16 %v605
    %v1147 = vunpack.c.h.b16 %v605
    %v1148 = vunpack.c.l.b16 %v606
    %v1149 = vunpack.c.h.b16 %v606
    %v1150 = vunpack.c.l.b16 %v607
    %v1151 = vunpack.c.h.b16 %v607
    %v1152 = vunpack.c.l.b16 %v608
    %v1153 = vunpack.c.h.b16 %v608
    %v1154 = vunpack.c.l.b16 %v609
    %v1155 = vunpack.c.h.b16 %v609
    %v1156 = vunpack.c.l.b16 %v610
    %v1157 = vunpack.c.h.b16 %v610
    %v1158 = vunpack.c.l.b16 %v611
    %v1159 = vunpack.c.h.b16 %v611
    %v1160 = vunpack.c.l.b16 %v612
    %v1161 = vunpack.c.h.b16 %v612
    %v1162 = vunpack.c.l.b16 %v613
    %v1163 = vunpack.c.h.b16 %v613
    %v1164 = vunpack.c.l.b16 %v614
    %v1165 = vunpack.c.h.b16 %v614
    %v1166 = vunpack.c.l.b16 %v615
    %v1167 = vunpack.c.h.b16 %v615
    %v1168 = vunpack.c.l.b16 %v616
    %v1169 = vunpack.c.h.b16 %v616
    %v1170 = vunpack.c.l.b16 %v617
    %v1171 = vunpack.c.h.b16 %v617
    %v1172 = vunpack.c.l.b16 %v618
    %v1173 = vunpack.c.h.b16 %v618
    %v1174 = vunpack.c.l.b16 %v619
    %v1175 = vunpack.c.h.b16 %v619
    %v1176 = vunpack.c.l.b16 %v620
    %v1177 = vunpack.c.h.b16 %v620
    %v1178 = vunpack.c.l.b16 %v621
    %v1179 = vunpack.c.h.b16 %v621
    %v1180 = vunpack.c.l.b16 %v622
    %v1181 = vunpack.c.h.b16 %v622
    %v1182 = vunpack.c.l.b16 %v623
    %v1183 = vunpack.c.h.b16 %v623
    %v1184 = vunpack.c.l.b16 %v624
    %v1185 = vunpack.c.h.b16 %v624
    %v1186 = vunpack.c.l.b16 %v625
    %v1187 = vunpack.c.h.b16 %v625
    %v1188 = vunpack.c.l.b16 %v626
    %v1189 = vunpack.c.h.b16 %v626
    %v1190 = vunpack.c.l.b16 %v627
    %v1191 = vunpack.c.h.b16 %v627
    %v1192 = vunpack.c.l.b16 %v628
    %v1193 = vunpack.c.h.b16 %v628
    %v1194 = vunpack.c.l.b16 %v629
    %v1195 = vunpack.c.h.b16 %v629
    %v1196 = vunpack.c.l.b16 %v630
    %v1197 = vunpack.c.h.b16 %v630
    %v1198 = vunpack.c.l.b16 %v631
    %v1199 = vunpack.c.h.b16 %v631
    %v1200 = vunpack.c.l.b16 %v632
    %v1201 = vunpack.c.h.b16 %v632
    %v1202 = vunpack.c.l.b16 %v633
    %v1203 = vunpack.c.h.b16 %v633
    %v1204 = vunpack.c.l.b16 %v634
    %v1205 = vunpack.c.h.b16 %v634
    %v1206 = vunpack.c.l.b16 %v635
    %v1207 = vunpack.c.h.b16 %v635
    %v1208 = vunpack.c.l.b16 %v636
    %v1209 = vunpack.c.h.b16 %v636
    %v1210 = vunpack.c.l.b16 %v637
    %v1211 = vunpack.c.h.b16 %v637
    %v1212 = vunpack.c.l.b16 %v638
    %v1213 = vunpack.c.h.b16 %v638
    %v1214 = vunpack.c.l.b16 %v639
    %v1215 = vunpack.c.h.b16 %v639
    %v1216 = vunpack.c.l.b16 %v640
    %v1217 = vunpack.c.h.b16 %v640
    %v1218 = vunpack.c.l.b16 %v641
    %v1219 = vunpack.c.h.b16 %v641
    %v1220 = vunpack.c.l.b16 %v642
    %v1221 = vunpack.c.h.b16 %v642
    %v1222 = vunpack.c.l.b16 %v643
    %v1223 = vunpack.c.h.b16 %v643
    %v1224 = vunpack.c.l.b16 %v644
    %v1225 = vunpack.c.h.b16 %v644
    %v1226 = vunpack.c.l.b16 %v645
    %v1227 = vunpack.c.h.b16 %v645
    %v1228 = vunpack.c.l.b16 %v646
    %v1229 = vunpack.c.h.b16 %v646
    %v1230 = vunpack.c.l.b16 %v647
    %v1231 = vunpack.c.h.b16 %v647
    %v1232 = vunpack.c.l.b16 %v648
    %v1233 = vunpack.c.h.b16 %v648
    %v1234 = vunpack.c.l.b16 %v649
    %v1235 = vunpack.c.h.b16 %v649
    %v1236 = vunpack.c.l.b16 %v650
    %v1237 = vunpack.c.h.b16 %v650
    %v1238 = vunpack.c.l.b16 %v651
    %v1239 = vunpack.c.h.b16 %v651
    %v1240 = vunpack.c.l.b16 %v652
    %v1241 = vunpack.c.h.b16 %v652
    %v1242 = vunpack.c.l.b16 %v653
    %v1243 = vunpack.c.h.b16 %v653
    %v1244 = vunpack.c.l.b16 %v654
    %v1245 = vunpack.c.h.b16 %v654
    %v1246 = vunpack.c.l.b16 %v655
    %v1247 = vunpack.c.h.b16 %v655
    %v1248 = vunpack.c.l.b16 %v656
    %v1249 = vunpack.c.h.b16 %v656
    %v1250 = vunpack.c.l.b16 %v657
    %v1251 = vunpack.c.h.b16 %v657
    %v1252 = vunpack.c.l.b16 %v658
    %v1253 = vunpack.c.h.b16 %v658
    %v1254 = vunpack.c.l.b16 %v659
    %v1255 = vunpack.c.h.b16 %v659
    %v1256 = vunpack.c.l.b16 %v660
    %v1257 = vunpack.c.h.b16 %v660
    %v1258 = vunpack.c.l.b16 %v661
    %v1259 = vunpack.c.h.b16 %v661
    %v1260 = vunpack.c.l.b16 %v662
    %v1261 = vunpack.c.h.b16 %v662
    %v1262 = vunpack.c.l.b16 %v663
    %v1263 = vunpack.c.h.b16 %v663
    %v1264 = vunpack.c.l.b16 %v664
    %v1265 = vunpack.c.h.b16 %v664
    %v1266 = vunpack.c.l.b16 %v665
    %v1267 = vunpack.c.h.b16 %v665
    %v1268 = vunpack.c.l.b16 %v666
    %v1269 = vunpack.c.h.b16 %v666
    %v1270 = vunpack.c.l.b16 %v667
    %v1271 = vunpack.c.h.b16 %v667
    %v1272 = vunpack.c.l.b16 %v668
    %v1273 = vunpack.c.h.b16 %v668
    %v1274 = vunpack.c.l.b16 %v669
    %v1275 = vunpack.c.h.b16 %v669
    %v1276 = vunpack.c.l.b16 %v670
    %v1277 = vunpack.c.h.b16 %v670
    %v1278 = vunpack.c.l.b16 %v671
    %v1279 = vunpack.c.h.b16 %v671
    %v1280 = vunpack.c.l.b16 %v672
    %v1281 = vunpack.c.h.b16 %v672
    %v1282 = vunpack.c.l.b16 %v673
    %v1283 = vunpack.c.h.b16 %v673
    %v1284 = vunpack.c.l.b16 %v674
    %v1285 = vunpack.c.h.b16 %v674
    %v1286 = vunpack.c.l.b16 %v675
    %v1287 = vunpack.c.h.b16 %v675
    %v1288 = vunpack.c.l.b16 %v676
    %v1289 = vunpack.c.h.b16 %v676
    %v1290 = vunpack.c.l.b16 %v677
    %v1291 = vunpack.c.h.b16 %v677
    %v1292 = vunpack.c.l.b16 %v678
    %v1293 = vunpack.c.h.b16 %v678
    %v1294 = vunpack.c.l.b16 %v679
    %v1295 = vunpack.c.h.b16 %v679
    %v1296 = vunpack.c.l.b16 %v680
    %v1297 = vunpack.c.h.b16 %v680
    %v1298 = vunpack.c.l.b16 %v681
    %v1299 = vunpack.c.h.b16 %v681
    %v1300 = vunpack.c.l.b16 %v682
    %v1301 = vunpack.c.h.b16 %v682
    %v1302 = vunpack.c.l.b16 %v683
    %v1303 = vunpack.c.h.b16 %v683
    %v1304 = vunpack.c.l.b16 %v684
    %v1305 = vunpack.c.h.b16 %v684
    %v1306 = vunpack.c.l.b16 %v685
    %v1307 = vunpack.c.h.b16 %v685
    %v1308 = vunpack.c.l.b16 %v686
    %v1309 = vunpack.c.h.b16 %v686
    %v1310 = vunpack.c.l.b16 %v687
    %v1311 = vunpack.c.h.b16 %v687
    %v1312 = vunpack.c.l.b16 %v688
    %v1313 = vunpack.c.h.b16 %v688
    %v1314 = vunpack.c.l.b16 %v689
    %v1315 = vunpack.c.h.b16 %v689
    %v1316 = vunpack.c.l.b16 %v690
    %v1317 = vunpack.c.h.b16 %v690
    %v1318 = vunpack.c.l.b16 %v691
    %v1319 = vunpack.c.h.b16 %v691
    %v1320 = vunpack.c.l.b16 %v692
    %v1321 = vunpack.c.h.b16 %v692
    %v1322 = vunpack.c.l.b16 %v693
    %v1323 = vunpack.c.h.b16 %v693
    %v1324 = vunpack.c.l.b16 %v694
    %v1325 = vunpack.c.h.b16 %v694
    %v1326 = vunpack.c.l.b16 %v695
    %v1327 = vunpack.c.h.b16 %v695
    %v1328 = vunpack.c.l.b16 %v696
    %v1329 = vunpack.c.h.b16 %v696
    %v1330 = vunpack.c.l.b16 %v697
    %v1331 = vunpack.c.h.b16 %v697
    %v1332 = vunpack.c.l.b16 %v698
    %v1333 = vunpack.c.h.b16 %v698
    %v1334 = vunpack.c.l.b16 %v699
    %v1335 = vunpack.c.h.b16 %v699
    %v1336 = vunpack.c.l.b16 %v700
    %v1337 = vunpack.c.h.b16 %v700
    %v1338 = vunpack.c.l.b16 %v701
    %v1339 = vunpack.c.h.b16 %v701
    %v1340 = vunpack.c.l.b16 %v702
    %v1341 = vunpack.c.h.b16 %v702
    %v1342 = vunpack.c.l.b16 %v703
    %v1343 = vunpack.c.h.b16 %v703
    %v1344 = vunpack.c.l.b16 %v704
    %v1345 = vunpack.c.h.b16 %v704
    %v1346 = vunpack.c.l.b16 %v705
    %v1347 = vunpack.c.h.b16 %v705
    %v1348 = vunpack.c.l.b16 %v706
    %v1349 = vunpack.c.h.b16 %v706
    %v1350 = vunpack.c.l.b16 %v707
    %v1351 = vunpack.c.h.b16 %v707
    %v1352 = vunpack.c.l.b16 %v708
    %v1353 = vunpack.c.h.b16 %v708
    %v1354 = vunpack.c.l.b16 %v709
    %v1355 = vunpack.c.h.b16 %v709
    %v1356 = vunpack.c.l.b16 %v710
    %v1357 = vunpack.c.h.b16 %v710
    %v1358 = vunpack.c.l.b16 %v711
    %v1359 = vunpack.c.h.b16 %v711
    %v1360 = vunpack.c.l.b16 %v712
    %v1361 = vunpack.c.h.b16 %v712
    %v1362 = vunpack.c.l.b16 %v713
    %v1363 = vunpack.c.h.b16 %v713
    %v1364 = vunpack.c.l.b16 %v714
    %v1365 = vunpack.c.h.b16 %v714
    %v1366 = vunpack.c.l.b16 %v715
    %v1367 = vunpack.c.h.b16 %v715
    %v1368 = vunpack.c.l.b16 %v716
    %v1369 = vunpack.c.h.b16 %v716
    %v1370 = vunpack.c.l.b16 %v717
    %v1371 = vunpack.c.h.b16 %v717
    %v1372 = vunpack.c.l.b16 %v718
    %v1373 = vunpack.c.h.b16 %v718
    %v1374 = vunpack.c.l.b16 %v719
    %v1375 = vunpack.c.h.b16 %v719
    %v1376 = vunpack.c.l.b16 %v720
    %v1377 = vunpack.c.h.b16 %v720
    %v1378 = vunpack.c.l.b16 %v721
    %v1379 = vunpack.c.h.b16 %v721
    %v1380 = vunpack.c.l.b16 %v722
    %v1381 = vunpack.c.h.b16 %v722
    %v1382 = vunpack.c.l.b16 %v723
    %v1383 = vunpack.c.h.b16 %v723
    %v1384 = vunpack.c.l.b16 %v724
    %v1385 = vunpack.c.h.b16 %v724
    %v1386 = vunpack.c.l.b16 %v725
    %v1387 = vunpack.c.h.b16 %v725
    %v1388 = vunpack.c.l.b16 %v726
    %v1389 = vunpack.c.h.b16 %v726
    %v1390 = vunpack.c.l.b16 %v727
    %v1391 = vunpack.c.h.b16 %v727
    %v1392 = vunpack.c.l.b16 %v728
    %v1393 = vunpack.c.h.b16 %v728
    %v1394 = vunpack.c.l.b16 %v729
    %v1395 = vunpack.c.h.b16 %v729
    %v1396 = vunpack.c.l.b16 %v730
    %v1397 = vunpack.c.h.b16 %v730
    %v1398 = vunpack.c.l.b16 %v731
    %v1399 = vunpack.c.h.b16 %v731
    %v1400 = vunpack.c.l.b16 %v732
    %v1401 = vunpack.c.h.b16 %v732
    %v1402 = vunpack.c.l.b16 %v733
    %v1403 = vunpack.c.h.b16 %v733
    %v1404 = vunpack.c.l.b16 %v734
    %v1405 = vunpack.c.h.b16 %v734
    %v1406 = vunpack.c.l.b16 %v735
    %v1407 = vunpack.c.h.b16 %v735
    %v1408 = vunpack.c.l.b16 %v736
    %v1409 = vunpack.c.h.b16 %v736
    %v1410 = vunpack.c.l.b16 %v737
    %v1411 = vunpack.c.h.b16 %v737
    %v1412 = vunpack.c.l.b16 %v738
    %v1413 = vunpack.c.h.b16 %v738
    %v1414 = vunpack.c.l.b16 %v739
    %v1415 = vunpack.c.h.b16 %v739
    %v1416 = vunpack.c.l.b16 %v740
    %v1417 = vunpack.c.h.b16 %v740
    %v1418 = vunpack.c.l.b16 %v741
    %v1419 = vunpack.c.h.b16 %v741
    %v1420 = vunpack.c.l.b16 %v742
    %v1421 = vunpack.c.h.b16 %v742
    %v1422 = vunpack.c.l.b16 %v743
    %v1423 = vunpack.c.h.b16 %v743
    %v1424 = vunpack.c.l.b16 %v744
    %v1425 = vunpack.c.h.b16 %v744
    %v1426 = vunpack.c.l.b16 %v745
    %v1427 = vunpack.c.h.b16 %v745
    %v1428 = vunpack.c.l.b16 %v746
    %v1429 = vunpack.c.h.b16 %v746
    %v1430 = vunpack.c.l.b16 %v747
    %v1431 = vunpack.c.h.b16 %v747
    %v1432 = vunpack.c.l.b16 %v748
    %v1433 = vunpack.c.h.b16 %v748
    %v1434 = vunpack.c.l.b16 %v749
    %v1435 = vunpack.c.h.b16 %v749
    %v1436 = vunpack.c.l.b16 %v750
    %v1437 = vunpack.c.h.b16 %v750
    %v1438 = vunpack.c.l.b16 %v751
    %v1439 = vunpack.c.h.b16 %v751
    %v1440 = vunpack.c.l.b16 %v752
    %v1441 = vunpack.c.h.b16 %v752
    %v1442 = vunpack.c.l.b16 %v753
    %v1443 = vunpack.c.h.b16 %v753
    %v1444 = vunpack.c.l.b16 %v754
    %v1445 = vunpack.c.h.b16 %v754
    %v1446 = vunpack.c.l.b16 %v755
    %v1447 = vunpack.c.h.b16 %v755
    %v1448 = vunpack.c.l.b16 %v756
    %v1449 = vunpack.c.h.b16 %v756
    %v1450 = vunpack.c.l.b16 %v757
    %v1451 = vunpack.c.h.b16 %v757
    %v1452 = vunpack.c.l.b16 %v758
    %v1453 = vunpack.c.h.b16 %v758
    %v1454 = vunpack.c.l.b16 %v759
    %v1455 = vunpack.c.h.b16 %v759
    %v1456 = vunpack.c.l.b16 %v760
    %v1457 = vunpack.c.h.b16 %v760
    %v1458 = vunpack.c.l.b16 %v761
    %v1459 = vunpack.c.h.b16 %v761
    %v1460 = vunpack.c.l.b16 %v762
    %v1461 = vunpack.c.h.b16 %v762
    %v1462 = vunpack.c.l.b16 %v763
    %v1463 = vunpack.c.h.b16 %v763
    %v1464 = vunpack.c.l.b16 %v764
    %v1465 = vunpack.c.h.b16 %v764
    %v1466 = vunpack.c.l.b16 %v765
    %v1467 = vunpack.c.h.b16 %v765
    %v1468 = vunpack.c.l.b16 %v766
    %v1469 = vunpack.c.h.b16 %v766
    %v1470 = vunpack.c.l.b16 %v767
    %v1471 = vunpack.c.h.b16 %v767
    %v1472 = vunpack.c.l.b16 %v768
    %v1473 = vunpack.c.h.b16 %v768
    %v1474 = vunpack.c.l.b16 %v769
    %v1475 = vunpack.c.h.b16 %v769
    %v1476 = vunpack.c.l.b16 %v770
    %v1477 = vunpack.c.h.b16 %v770
    %v1478 = vunpack.c.l.b16 %v771
    %v1479 = vunpack.c.h.b16 %v771
    %v1480 = vunpack.c.l.b16 %v772
    %v1481 = vunpack.c.h.b16 %v772
    %v1482 = vunpack.c.l.b16 %v773
    %v1483 = vunpack.c.h.b16 %v773
    %v1484 = vunpack.c.l.b16 %v774
    %v1485 = vunpack.c.h.b16 %v774
    %v1486 = vunpack.c.l.b16 %v775
    %v1487 = vunpack.c.h.b16 %v775
    %v1488 = vunpack.c.l.b16 %v776
    %v1489 = vunpack.c.h.b16 %v776
    %v1490 = vunpack.c.l.b16 %v777
    %v1491 = vunpack.c.h.b16 %v777
    %v1492 = vunpack.c.l.b16 %v778
    %v1493 = vunpack.c.h.b16 %v778
    %v1494 = vunpack.c.l.b16 %v779
    %v1495 = vunpack.c.h.b16 %v779
    %v1496 = vunpack.c.l.b16 %v780
    %v1497 = vunpack.c.h.b16 %v780
    %v1498 = vunpack.c.l.b16 %v781
    %v1499 = vunpack.c.h.b16 %v781
    %v1500 = vunpack.c.l.b16 %v782
    %v1501 = vunpack.c.h.b16 %v782
    %v1502 = vunpack.c.l.b16 %v783
    %v1503 = vunpack.c.h.b16 %v783
    %v1504 = vunpack.c.l.b16 %v784
    %v1505 = vunpack.c.h.b16 %v784
    %v1506 = vunpack.c.l.b16 %v785
    %v1507 = vunpack.c.h.b16 %v785
    %v1508 = vunpack.c.l.b16 %v786
    %v1509 = vunpack.c.h.b16 %v786
    %v1510 = vunpack.c.l.b16 %v787
    %v1511 = vunpack.c.h.b16 %v787
    %v1512 = vunpack.c.l.b16 %v788
    %v1513 = vunpack.c.h.b16 %v788
    %v1514 = vunpack.c.l.b16 %v789
    %v1515 = vunpack.c.h.b16 %v789
    %v1516 = vunpack.c.l.b16 %v790
    %v1517 = vunpack.c.h.b16 %v790
    %v1518 = vunpack.c.l.b16 %v791
    %v1519 = vunpack.c.h.b16 %v791
    %v1520 = vunpack.c.l.b16 %v792
    %v1521 = vunpack.c.h.b16 %v792
    %v1522 = vunpack.c.l.b16 %v793
    %v1523 = vunpack.c.h.b16 %v793
    %v1524 = vunpack.c.l.b16 %v794
    %v1525 = vunpack.c.h.b16 %v794
    %v1526 = vunpack.c.l.b16 %v795
    %v1527 = vunpack.c.h.b16 %v795
    %v1528 = vunpack.c.l.b16 %v796
    %v1529 = vunpack.c.h.b16 %v796
    %v1530 = vunpack.c.l.b16 %v797
    %v1531 = vunpack.c.h.b16 %v797
    %v1532 = vunpack.c.l.b16 %v798
    %v1533 = vunpack.c.h.b16 %v798
    %v1534 = vunpack.c.l.b16 %v799
    %v1535 = vunpack.c.h.b16 %v799
    %v1536 = vunpack.c.l.b16 %v800
    %v1537 = vunpack.c.h.b16 %v800
    %v1538 = vunpack.c.l.b16 %v801
    %v1539 = vunpack.c.h.b16 %v801
    %v1540 = vunpack.c.l.b16 %v802
    %v1541 = vunpack.c.h.b16 %v802
    %v1542 = vunpack.c.l.b16 %v803
    %v1543 = vunpack.c.h.b16 %v803
    %v1544 = vunpack.c.l.b16 %v804
    %v1545 = vunpack.c.h.b16 %v804
    %v1546 = vunpack.c.l.b16 %v805
    %v1547 = vunpack.c.h.b16 %v805
    %v1548 = vunpack.c.l.b16 %v806
    %v1549 = vunpack.c.h.b16 %v806
    %v1550 = vunpack.c.l.b16 %v807
    %v1551 = vunpack.c.h.b16 %v807
    %v1552 = vunpack.c.l.b16 %v808
    %v1553 = vunpack.c.h.b16 %v808
    %v1554 = vunpack.c.l.b16 %v809
    %v1555 = vunpack.c.h.b16 %v809
    %v1556 = vunpack.c.l.b16 %v810
    %v1557 = vunpack.c.h.b16 %v810
    %v1558 = vunpack.c.l.b16 %v811
    %v1559 = vunpack.c.h.b16 %v811
    %v1560 = vunpack.c.l.b16 %v812
    %v1561 = vunpack.c.h.b16 %v812
    %v1562 = vunpack.c.l.b16 %v813
    %v1563 = vunpack.c.h.b16 %v813
    %v1564 = vunpack.c.l.b16 %v814
    %v1565 = vunpack.c.h.b16 %v814
    %v1566 = vunpack.c.l.b16 %v815
    %v1567 = vunpack.c.h.b16 %v815
    %v1568 = vunpack.c.l.b16 %v816
    %v1569 = vunpack.c.h.b16 %v816
    %v1570 = vunpack.c.l.b16 %v817
    %v1571 = vunpack.c.h.b16 %v817
    %v1572 = vunpack.c.l.b16 %v818
    %v1573 = vunpack.c.h.b16 %v818
    %v1574 = vunpack.c.l.b16 %v819
    %v1575 = vunpack.c.h.b16 %v819
    %v1576 = vunpack.c.l.b16 %v820
    %v1577 = vunpack.c.h.b16 %v820
    %v1578 = vunpack.c.l.b16 %v821
    %v1579 = vunpack.c.h.b16 %v821
    %v1580 = vunpack.c.l.b16 %v822
    %v1581 = vunpack.c.h.b16 %v822
    %v1582 = vunpack.c.l.b16 %v823
    %v1583 = vunpack.c.h.b16 %v823
    %v1584 = vunpack.c.l.b16 %v824
    %v1585 = vunpack.c.h.b16 %v824
    %v1586 = vunpack.c.l.b16 %v825
    %v1587 = vunpack.c.h.b16 %v825
    %v1588 = vunpack.c.l.b16 %v826
    %v1589 = vunpack.c.h.b16 %v826
    %v1590 = vunpack.c.l.b16 %v827
    %v1591 = vunpack.c.h.b16 %v827
    %v1592 = vunpack.c.l.b16 %v828
    %v1593 = vunpack.c.h.b16 %v828
    %v1594 = vunpack.c.l.b16 %v829
    %v1595 = vunpack.c.h.b16 %v829
    %v1596 = vunpack.c.l.b16 %v830
    %v1597 = vunpack.c.h.b16 %v830
    %v1598 = vunpack.c.l.b16 %v831
    %v1599 = vunpack.c.h.b16 %v831
    %v1600 = vunpack.c.l.b16 %v832
    %v1601 = vunpack.c.h.b16 %v832
    %v1602 = vunpack.c.l.b16 %v833
    %v1603 = vunpack.c.h.b16 %v833
    %v1604 = vunpack.c.l.b16 %v834
    %v1605 = vunpack.c.h.b16 %v834
    %v1606 = vunpack.c.l.b16 %v835
    %v1607 = vunpack.c.h.b16 %v835
    %v1608 = vunpack.c.l.b16 %v836
    %v1609 = vunpack.c.h.b16 %v836
    %v1610 = vunpack.c.l.b16 %v837
    %v1611 = vunpack.c.h.b16 %v837
    %v1612 = vunpack.c.l.b16 %v838
    %v1613 = vunpack.c.h.b16 %v838
    %v1614 = vunpack.c.l.b16 %v839
    %v1615 = vunpack.c.h.b16 %v839
    %v1616 = vunpack.c.l.b16 %v840
    %v1617 = vunpack.c.h.b16 %v840
    %v1618 = vunpack.c.l.b16 %v841
    %v1619 = vunpack.c.h.b16 %v841
    %v1620 = vpack.c.b16 %v1112, %v1108
    %v1621 = vpack.c.b16 %v1113, %v1109
    %v1622 = vpack.c.b16 %v1114, %v1110
    %v1623 = vpack.c.b16 %v1115, %v1111
    %v1624 = vpack.c.b16 %v1120, %v1116
    %v1625 = vpack.c.b16 %v1121, %v1117
    %v1626 = vpack.c.b16 %v1122, %v1118
    %v1627 = vpack.c.b16 %v1123, %v1119
    %v1628 = vpack.c.b16 %v1128, %v1124
    %v1629 = vpack.c.b16 %v1129, %v1125
    %v1630 = vpack.c.b16 %v1130, %v1126
    %v1631 = vpack.c.b16 %v1131, %v1127
    %v1632 = vpack.c.b16 %v1136, %v1132
    %v1633 = vpack.c.b16 %v1137, %v1133
    %v1634 = vpack.c.b16 %v1138, %v1134
    %v1635 = vpack.c.b16 %v1139, %v1135
    %v1636 = vpack.c.b16 %v1144, %v1140
    %v1637 = vpack.c.b16 %v1145, %v1141
    %v1638 = vpack.c.b16 %v1146, %v1142
    %v1639 = vpack.c.b16 %v1147, %v1143
    %v1640 = vpack.c.b16 %v1152, %v1148
    %v1641 = vpack.c.b16 %v1153, %v1149
    %v1642 = vpack.c.b16 %v1154, %v1150
    %v1643 = vpack.c.b16 %v1155, %v1151
    %v1644 = vpack.c.b16 %v1160, %v1156
    %v1645 = vpack.c.b16 %v1161, %v1157
    %v1646 = vpack.c.b16 %v1162, %v1158
    %v1647 = vpack.c.b16 %v1163, %v1159
    %v1648 = vpack.c.b16 %v1168, %v1164
    %v1649 = vpack.c.b16 %v1169, %v1165
    %v1650 = vpack.c.b16 %v1170, %v1166
    %v1651 = vpack.c.b16 %v1171, %v1167
    %v1652 = vpack.c.b16 %v1176, %v1172
    %v1653 = vpack.c.b16 %v1177, %v1173
    %v1654 = vpack.c.b16 %v1178, %v1174
    %v1655 = vpack.c.b16 %v1179, %v1175
    %v1656 = vpack.c.b16 %v1184, %v1180
    %v1657 = vpack.c.b16 %v1185, %v1181
    %v1658 = vpack.c.b16 %v1186, %v1182
    %v1659 = vpack.c.b16 %v1187, %v1183
    %v1660 = vpack.c.b16 %v1192, %v1188
    %v1661 = vpack.c.b16 %v1193, %v1189
    %v1662 = vpack.c.b16 %v1194, %v1190
    %v1663 = vpack.c.b16 %v1195, %v1191
    %v1664 = vpack.c.b16 %v1200, %v1196
    %v1665 = vpack.c.b16 %v1201, %v1197
    %v1666 = vpack.c.b16 %v1202, %v1198
    %v1667 = vpack.c.b16 %v1203, %v1199
    %v1668 = vpack.c.b16 %v1208, %v1204
    %v1669 = vpack.c.b16 %v1209, %v1205
    %v1670 = vpack.c.b16 %v1210, %v1206
    %v1671 = vpack.c.b16 %v1211, %v1207
    %v1672 = vpack.c.b16 %v1216, %v1212
    %v1673 = vpack.c.b16 %v1217, %v1213
    %v1674 = vpack.c.b16 %v1218, %v1214
    %v1675 = vpack.c.b16 %v1219, %v1215
    %v1676 = vpack.c.b16 %v1224, %v1220
    %v1677 = vpack.c.b16 %v1225, %v1221
    %v1678 = vpack.c.b16 %v1226, %v1222
    %v1679 = vpack.c.b16 %v1227, %v1223
    %v1680 = vpack.c.b16 %v1232, %v1228
    %v1681 = vpack.c.b16 %v1233, %v1229
    %v1682 = vpack.c.b16 %v1234, %v1230
    %v1683 = vpack.c.b16 %v1235, %v1231
    %v1684 = vpack.c.b16 %v1240, %v1236
    %v1685 = vpack.c.b16 %v1241, %v1237
    %v1686 = vpack.c.b16 %v1242, %v1238
    %v1687 = vpack.c.b16 %v1243, %v1239
    %v1688 = vpack.c.b16 %v1248, %v1244
    %v1689 = vpack.c.b16 %v1249, %v1245
    %v1690 = vpack.c.b16 %v1250, %v1246
    %v1691 = vpack.c.b16 %v1251, %v1247
    %v1692 = vpack.c.b16 %v1256, %v1252
    %v1693 = vpack.c.b16 %v1257, %v1253
    %v1694 = vpack.c.b16 %v1258, %v1254
    %v1695 = vpack.c.b16 %v1259, %v1255
    %v1696 = vpack.c.b16 %v1264, %v1260
    %v1697 = vpack.c.b16 %v1265, %v1261
    %v1698 = vpack.c.b16 %v1266, %v1262
    %v1699 = vpack.c.b16 %v1267, %v1263
    %v1700 = vpack.c.b16 %v1272, %v1268
    %v1701 = vpack.c.b16 %v1273, %v1269
    %v1702 = vpack.c.b16 %v1274, %v1270
    %v1703 = vpack.c.b16 %v1275, %v1271
    %v1704 = vpack.c.b16 %v1280, %v1276
    %v1705 = vpack.c.b16 %v1281, %v1277
    %v1706 = vpack.c.b16 %v1282, %v1278
    %v1707 = vpack.c.b16 %v1283, %v1279
    %v1708 = vpack.c.b16 %v1288, %v1284
    %v1709 = vpack.c.b16 %v1289, %v1285
    %v1710 = vpack.c.b16 %v1290, %v1286
    %v1711 = vpack.c.b16 %v1291, %v1287
    %v1712 = vpack.c.b16 %v1296, %v1292
    %v1713 = vpack.c.b16 %v1297, %v1293
    %v1714 = vpack.c.b16 %v1298, %v1294
    %v1715 = vpack.c.b16 %v1299, %v1295
    %v1716 = vpack.c.b16 %v1304, %v1300
    %v1717 = vpack.c.b16 %v1305, %v1301
    %v1718 = vpack.c.b16 %v1306, %v1302
    %v1719 = vpack.c.b16 %v1307, %v1303
    %v1720 = vpack.c.b16 %v1312, %v1308
    %v1721 = vpack.c.b16 %v1313, %v1309
    %v1722 = vpack.c.b16 %v1314, %v1310
    %v1723 = vpack.c.b16 %v1315, %v1311
    %v1724 = vpack.c.b16 %v1320, %v1316
    %v1725 = vpack.c.b16 %v1321, %v1317
    %v1726 = vpack.c.b16 %v1322, %v1318
    %v1727 = vpack.c.b16 %v1323, %v1319
    %v1728 = vpack.c.b16 %v1328, %v1324
    %v1729 = vpack.c.b16 %v1329, %v1325
    %v1730 = vpack.c.b16 %v1330, %v1326
    %v1731 = vpack.c.b16 %v1331, %v1327
    %v1732 = vpack.c.b16 %v1336, %v1332
    %v1733 = vpack.c.b16 %v1337, %v1333
    %v1734 = vpack.c.b16 %v1338, %v1334
    %v1735 = vpack.c.b16 %v1339, %v1335
    %v1736 = vpack.c.b16 %v1344, %v1340
    %v1737 = vpack.c.b16 %v1345, %v1341
    %v1738 = vpack.c.b16 %v1346, %v1342
    %v1739 = vpack.c.b16 %v1347, %v1343
    %v1740 = vpack.c.b16 %v1352, %v1348
    %v1741 = vpack.c.b16 %v1353, %v1349
    %v1742 = vpack.c.b16 %v1354, %v1350
    %v1743 = vpack.c.b16 %v1355, %v1351
    %v1744 = vpack.c.b16 %v1360, %v1356
    %v1745 = vpack.c.b16 %v1361, %v1357
    %v1746 = vpack.c.b16 %v1362, %v1358
    %v1747 = vpack.c.b16 %v1363, %v1359
    %v1748 = vpack.c.b16 %v1368, %v1364
    %v1749 = vpack.c.b16 %v1369, %v1365
    %v1750 = vpack.c.b16 %v1370, %v1366
    %v1751 = vpack.c.b16 %v1371, %v1367
    %v1752 = vpack.c.b16 %v1376, %v1372
    %v1753 = vpack.c.b16 %v1377, %v1373
    %v1754 = vpack.c.b16 %v1378, %v1374
    %v1755 = vpack.c.b16 %v1379, %v1375
    %v1756 = vpack.c.b16 %v1384, %v1380
    %v1757 = vpack.c.b16 %v1385, %v1381
    %v1758 = vpack.c.b16 %v1386, %v1382
    %v1759 = vpack.c.b16 %v1387, %v1383
    %v1760 = vpack.c.b16 %v1392, %v1388
    %v1761 = vpack.c.b16 %v1393, %v1389
    %v1762 = vpack.c.b16 %v1394, %v1390
    %v1763 = vpack.c.b16 %v1395, %v1391
    %v1764 = vpack.c.b16 %v1400, %v1396
    %v1765 = vpack.c.b16 %v1401, %v1397
    %v1766 = vpack.c.b16 %v1402, %v1398
    %v1767 = vpack.c.b16 %v1403, %v1399
    %v1768 = vpack.c.b16 %v1408, %v1404
    %v1769 = vpack.c.b16 %v1409, %v1405
    %v1770 = vpack.c.b16 %v1410, %v1406
    %v1771 = vpack.c.b16 %v1411, %v1407
    %v1772 = vpack.c.b16 %v1416, %v1412
    %v1773 = vpack.c.b16 %v1417, %v1413
    %v1774 = vpack.c.b16 %v1418, %v1414
    %v1775 = vpack.c.b16 %v1419, %v1415
    %v1776 = vpack.c.b16 %v1424, %v1420
    %v1777 = vpack.c.b16 %v1425, %v1421
    %v1778 = vpack.c.b16 %v1426, %v1422
    %v1779 = vpack.c.b16 %v1427, %v1423
    %v1780 = vpack.c.b16 %v1432, %v1428
    %v1781 = vpack.c.b16 %v1433, %v1429
    %v1782 = vpack.c.b16 %v1434, %v1430
    %v1783 = vpack.c.b16 %v1435, %v1431
    %v1784 = vpack.c.b16 %v1440, %v1436
    %v1785 = vpack.c.b16 %v1441, %v1437
    %v1786 = vpack.c.b16 %v1442, %v1438
    %v1787 = vpack.c.b16 %v1443, %v1439
    %v1788 = vpack.c.b16 %v1448, %v1444
    %v1789 = vpack.c.b16 %v1449, %v1445
    %v1790 = vpack.c.b16 %v1450, %v1446
    %v1791 = vpack.c.b16 %v1451, %v1447
    %v1792 = vpack.c.b16 %v1456, %v1452
    %v1793 = vpack.c.b16 %v1457, %v1453
    %v1794 = vpack.c.b16 %v1458, %v1454
    %v1795 = vpack.c.b16 %v1459, %v1455
    %v1796 = vpack.c.b16 %v1464, %v1460
    %v1797 = vpack.c.b16 %v1465, %v1461
    %v1798 = vpack.c.b16 %v1466, %v1462
    %v1799 = vpack.c.b16 %v1467, %v1463
    %v1800 = vpack.c.b16 %v1472, %v1468
    %v1801 = vpack.c.b16 %v1473, %v1469
    %v1802 = vpack.c.b16 %v1474, %v1470
    %v1803 = vpack.c.b16 %v1475, %v1471
    %v1804 = vpack.c.b16 %v1480, %v1476
    %v1805 = vpack.c.b16 %v1481, %v1477
    %v1806 = vpack.c.b16 %v1482, %v1478
    %v1807 = vpack.c.b16 %v1483, %v1479
    %v1808 = vpack.c.b16 %v1488, %v1484
    %v1809 = vpack.c.b16 %v1489, %v1485
    %v1810 = vpack.c.b16 %v1490, %v1486
    %v1811 = vpack.c.b16 %v1491, %v1487
    %v1812 = vpack.c.b16 %v1496, %v1492
    %v1813 = vpack.c.b16 %v1497, %v1493
    %v1814 = vpack.c.b16 %v1498, %v1494
    %v1815 = vpack.c.b16 %v1499, %v1495
    %v1816 = vpack.c.b16 %v1504, %v1500
    %v1817 = vpack.c.b16 %v1505, %v1501
    %v1818 = vpack.c.b16 %v1506, %v1502
    %v1819 = vpack.c.b16 %v1507, %v1503
    %v1820 = vpack.c.b16 %v1512, %v1508
    %v1821 = vpack.c.b16 %v1513, %v1509
    %v1822 = vpack.c.b16 %v1514, %v1510
    %v1823 = vpack.c.b16 %v1515, %v1511
    %v1824 = vpack.c.b16 %v1520, %v1516
    %v1825 = vpack.c.b16 %v1521, %v1517
    %v1826 = vpack.c.b16 %v1522, %v1518
    %v1827 = vpack.c.b16 %v1523, %v1519
    %v1828 = vpack.c.b16 %v1528, %v1524
    %v1829 = vpack.c.b16 %v1529, %v1525
    %v1830 = vpack.c.b16 %v1530, %v1526
    %v1831 = vpack.c.b16 %v1531, %v1527
    %v1832 = vpack.c.b16 %v1536, %v1532
    %v1833 = vpack.c.b16 %v1537, %v1533
    %v1834 = vpack.c.b16 %v1538, %v1534
    %v1835 = vpack.c.b16 %v1539, %v1535
    %v1836 = vpack.c.b16 %v1544, %v1540
    %v1837 = vpack.c.b16 %v1545, %v1541
    %v1838 = vpack.c.b16 %v1546, %v1542
    %v1839 = vpack.c.b16 %v1547, %v1543
    %v1840 = vpack.c.b16 %v1552, %v1548
    %v1841 = vpack.c.b16 %v1553, %v1549
    %v1842 = vpack.c.b16 %v1554, %v1550
    %v1843 = vpack.c.b16 %v1555, %v1551
    %v1844 = vpack.c.b16 %v1560, %v1556
    %v1845 = vpack.c.b16 %v1561, %v1557
    %v1846 = vpack.c.b16 %v1562, %v1558
    %v1847 = vpack.c.b16 %v1563, %v1559
    %v1848 = vpack.c.b16 %v1568, %v1564
    %v1849 = vpack.c.b16 %v1569, %v1565
    %v1850 = vpack.c.b16 %v1570, %v1566
    %v1851 = vpack.c.b16 %v1571, %v1567
    %v1852 = vpack.c.b16 %v1576, %v1572
    %v1853 = vpack.c.b16 %v1577, %v1573
    %v1854 = vpack.c.b16 %v1578, %v1574
    %v1855 = vpack.c.b16 %v1579, %v1575
    %v1856 = vpack.c.b16 %v1584, %v1580
    %v1857 = vpack.c.b16 %v1585, %v1581
    %v1858 = vpack.c.b16 %v1586, %v1582
    %v1859 = vpack.c.b16 %v1587, %v1583
    %v1860 = vpack.c.b16 %v1592, %v1588
    %v1861 = vpack.c.b16 %v1593, %v1589
    %v1862 = vpack.c.b16 %v1594, %v1590
    %v1863 = vpack.c.b16 %v1595, %v1591
    %v1864 = vpack.c.b16 %v1600, %v1596
    %v1865 = vpack.c.b16 %v1601, %v1597
    %v1866 = vpack.c.b16 %v1602, %v1598
    %v1867 = vpack.c.b16 %v1603, %v1599
    %v1868 = vpack.c.b16 %v1608, %v1604
    %v1869 = vpack.c.b16 %v1609, %v1605
    %v1870 = vpack.c.b16 %v1610, %v1606
    %v1871 = vpack.c.b16 %v1611, %v1607
    %v1872 = vpack.c.b16 %v1616, %v1612
    %v1873 = vpack.c.b16 %v1617, %v1613
    %v1874 = vpack.c.b16 %v1618, %v1614
    %v1875 = vpack.c.b16 %v1619, %v1615
    %2132 = vmatpush.bf16.msra.mxu0 %v1648
    %2133 = vmatpush.bf16.msra.mxu0 %v1644
    %2134 = vmatpush.bf16.msra.mxu0 %v1640
    %2135 = vmatpush.bf16.msra.mxu0 %v1636
    %2136 = vmatpush.bf16.msra.mxu0 %v1632
    %2137 = vmatpush.bf16.msra.mxu0 %v1628
    %2138 = vmatpush.bf16.msra.mxu0 %v1624
    %2139 = vmatpush.bf16.msra.mxu0 %v1620
    %2140 = vmatmul.bf16.gmra.mxu0 %v578
    %v2141 = vpop.f32.mrf.mxu0
    %v2142 = vadd.f32 %v844, %v2141
    %v2143 = vpop.f32.mrf.mxu0
    %2144 = vdwg.mxu0
    %2145 = vmatpush.bf16.msra.mxu0 %v1680
    %2146 = vmatpush.bf16.msra.mxu0 %v1676
    %2147 = vmatpush.bf16.msra.mxu0 %v1672
    %2148 = vmatpush.bf16.msra.mxu0 %v1668
    %2149 = vmatpush.bf16.msra.mxu0 %v1664
    %2150 = vmatpush.bf16.msra.mxu0 %v1660
    %2151 = vmatpush.bf16.msra.mxu0 %v1656
    %2152 = vmatpush.bf16.msra.mxu0 %v1652
    %2153 = vmatmul.bf16.gmra.mxu0 %v579
    %v2154 = vpop.f32.mrf.mxu0
    %v2155 = vadd.f32 %v2142, %v2154
    %v2156 = vpop.f32.mrf.mxu0
    %2157 = vdwg.mxu0
    %2158 = vmatpush.bf16.msra.mxu0 %v1712
    %2159 = vmatpush.bf16.msra.mxu0 %v1708
    %2160 = vmatpush.bf16.msra.mxu0 %v1704
    %2161 = vmatpush.bf16.msra.mxu0 %v1700
    %2162 = vmatpush.bf16.msra.mxu0 %v1696
    %2163 = vmatpush.bf16.msra.mxu0 %v1692
    %2164 = vmatpush.bf16.msra.mxu0 %v1688
    %2165 = vmatpush.bf16.msra.mxu0 %v1684
    %2166 = vmatmul.bf16.gmra.mxu0 %v580
    %v2167 = vpop.f32.mrf.mxu0
    %v2168 = vadd.f32 %v2155, %v2167
    %v2169 = vpop.f32.mrf.mxu0
    %2170 = vdwg.mxu0
    %2171 = vmatpush.bf16.msra.mxu0 %v1744
    %2172 = vmatpush.bf16.msra.mxu0 %v1740
    %2173 = vmatpush.bf16.msra.mxu0 %v1736
    %2174 = vmatpush.bf16.msra.mxu0 %v1732
    %2175 = vmatpush.bf16.msra.mxu0 %v1728
    %2176 = vmatpush.bf16.msra.mxu0 %v1724
    %2177 = vmatpush.bf16.msra.mxu0 %v1720
    %2178 = vmatpush.bf16.msra.mxu0 %v1716
    %2179 = vmatmul.bf16.gmra.mxu0 %v581
    %v2180 = vpop.f32.mrf.mxu0
    %v2181 = vadd.f32 %v2168, %v2180
    %v2182 = vpop.f32.mrf.mxu0
    %2183 = vdwg.mxu0
    %2184 = vmatpush.bf16.msra.mxu0 %v1776
    %2185 = vmatpush.bf16.msra.mxu0 %v1772
    %2186 = vmatpush.bf16.msra.mxu0 %v1768
    %2187 = vmatpush.bf16.msra.mxu0 %v1764
    %2188 = vmatpush.bf16.msra.mxu0 %v1760
    %2189 = vmatpush.bf16.msra.mxu0 %v1756
    %2190 = vmatpush.bf16.msra.mxu0 %v1752
    %2191 = vmatpush.bf16.msra.mxu0 %v1748
    %2192 = vmatmul.bf16.gmra.mxu0 %v582
    %v2193 = vpop.f32.mrf.mxu0
    %v2194 = vadd.f32 %v2181, %v2193
    %v2195 = vpop.f32.mrf.mxu0
    %2196 = vdwg.mxu0
    %2197 = vmatpush.bf16.msra.mxu0 %v1808
    %2198 = vmatpush.bf16.msra.mxu0 %v1804
    %2199 = vmatpush.bf16.msra.mxu0 %v1800
    %2200 = vmatpush.bf16.msra.mxu0 %v1796
    %2201 = vmatpush.bf16.msra.mxu0 %v1792
    %2202 = vmatpush.bf16.msra.mxu0 %v1788
    %2203 = vmatpush.bf16.msra.mxu0 %v1784
    %2204 = vmatpush.bf16.msra.mxu0 %v1780
    %2205 = vmatmul.bf16.gmra.mxu0 %v583
    %v2206 = vpop.f32.mrf.mxu0
    %v2207 = vadd.f32 %v2194, %v2206
    %v2208 = vpop.f32.mrf.mxu0
    %2209 = vdwg.mxu0
    %2210 = vmatpush.bf16.msra.mxu0 %v1840
    %2211 = vmatpush.bf16.msra.mxu0 %v1836
    %2212 = vmatpush.bf16.msra.mxu0 %v1832
    %2213 = vmatpush.bf16.msra.mxu0 %v1828
    %2214 = vmatpush.bf16.msra.mxu0 %v1824
    %2215 = vmatpush.bf16.msra.mxu0 %v1820
    %2216 = vmatpush.bf16.msra.mxu0 %v1816
    %2217 = vmatpush.bf16.msra.mxu0 %v1812
    %2218 = vmatmul.bf16.gmra.mxu0 %v584
    %v2219 = vpop.f32.mrf.mxu0
    %v2220 = vadd.f32 %v2207, %v2219
    %v2221 = vpop.f32.mrf.mxu0
    %2222 = vdwg.mxu0
    %2223 = vmatpush.bf16.msra.mxu0 %v1872
    %2224 = vmatpush.bf16.msra.mxu0 %v1868
    %2225 = vmatpush.bf16.msra.mxu0 %v1864
    %2226 = vmatpush.bf16.msra.mxu0 %v1860
    %2227 = vmatpush.bf16.msra.mxu0 %v1856
    %2228 = vmatpush.bf16.msra.mxu0 %v1852
    %2229 = vmatpush.bf16.msra.mxu0 %v1848
    %2230 = vmatpush.bf16.msra.mxu0 %v1844
    %2231 = vmatmul.bf16.gmra.mxu0 %v585
    %v2232 = vpop.f32.mrf.mxu0
    %v2233 = vadd.f32 %v2220, %v2232
    %v2234 = vpop.f32.mrf.mxu0
    %2235 = vdwg.mxu0
    %2236 = vmatpush.bf16.msra.mxu0 %v1649
    %2237 = vmatpush.bf16.msra.mxu0 %v1645
    %2238 = vmatpush.bf16.msra.mxu0 %v1641
    %2239 = vmatpush.bf16.msra.mxu0 %v1637
    %2240 = vmatpush.bf16.msra.mxu0 %v1633
    %2241 = vmatpush.bf16.msra.mxu0 %v1629
    %2242 = vmatpush.bf16.msra.mxu0 %v1625
    %2243 = vmatpush.bf16.msra.mxu0 %v1621
    %2244 = vmatmul.bf16.gmra.mxu0 %v578
    %v2245 = vpop.f32.mrf.mxu0
    %v2246 = vadd.f32 %v845, %v2245
    %v2247 = vpop.f32.mrf.mxu0
    %2248 = vdwg.mxu0
    %2249 = vmatpush.bf16.msra.mxu0 %v1681
    %2250 = vmatpush.bf16.msra.mxu0 %v1677
    %2251 = vmatpush.bf16.msra.mxu0 %v1673
    %2252 = vmatpush.bf16.msra.mxu0 %v1669
    %2253 = vmatpush.bf16.msra.mxu0 %v1665
    %2254 = vmatpush.bf16.msra.mxu0 %v1661
    %2255 = vmatpush.bf16.msra.mxu0 %v1657
    %2256 = vmatpush.bf16.msra.mxu0 %v1653
    %2257 = vmatmul.bf16.gmra.mxu0 %v579
    %v2258 = vpop.f32.mrf.mxu0
    %v2259 = vadd.f32 %v2246, %v2258
    %v2260 = vpop.f32.mrf.mxu0
    %2261 = vdwg.mxu0
    %2262 = vmatpush.bf16.msra.mxu0 %v1713
    %2263 = vmatpush.bf16.msra.mxu0 %v1709
    %2264 = vmatpush.bf16.msra.mxu0 %v1705
    %2265 = vmatpush.bf16.msra.mxu0 %v1701
    %2266 = vmatpush.bf16.msra.mxu0 %v1697
    %2267 = vmatpush.bf16.msra.mxu0 %v1693
    %2268 = vmatpush.bf16.msra.mxu0 %v1689
    %2269 = vmatpush.bf16.msra.mxu0 %v1685
    %2270 = vmatmul.bf16.gmra.mxu0 %v580
    %v2271 = vpop.f32.mrf.mxu0
    %v2272 = vadd.f32 %v2259, %v2271
    %v2273 = vpop.f32.mrf.mxu0
    %2274 = vdwg.mxu0
    %2275 = vmatpush.bf16.msra.mxu0 %v1745
    %2276 = vmatpush.bf16.msra.mxu0 %v1741
    %2277 = vmatpush.bf16.msra.mxu0 %v1737
    %2278 = vmatpush.bf16.msra.mxu0 %v1733
    %2279 = vmatpush.bf16.msra.mxu0 %v1729
    %2280 = vmatpush.bf16.msra.mxu0 %v1725
    %2281 = vmatpush.bf16.msra.mxu0 %v1721
    %2282 = vmatpush.bf16.msra.mxu0 %v1717
    %2283 = vmatmul.bf16.gmra.mxu0 %v581
    %v2284 = vpop.f32.mrf.mxu0
    %v2285 = vadd.f32 %v2272, %v2284
    %v2286 = vpop.f32.mrf.mxu0
    %2287 = vdwg.mxu0
    %2288 = vmatpush.bf16.msra.mxu0 %v1777
    %2289 = vmatpush.bf16.msra.mxu0 %v1773
    %2290 = vmatpush.bf16.msra.mxu0 %v1769
    %2291 = vmatpush.bf16.msra.mxu0 %v1765
    %2292 = vmatpush.bf16.msra.mxu0 %v1761
    %2293 = vmatpush.bf16.msra.mxu0 %v1757
    %2294 = vmatpush.bf16.msra.mxu0 %v1753
    %2295 = vmatpush.bf16.msra.mxu0 %v1749
    %2296 = vmatmul.bf16.gmra.mxu0 %v582
    %v2297 = vpop.f32.mrf.mxu0
    %v2298 = vadd.f32 %v2285, %v2297
    %v2299 = vpop.f32.mrf.mxu0
    %2300 = vdwg.mxu0
    %2301 = vmatpush.bf16.msra.mxu0 %v1809
    %2302 = vmatpush.bf16.msra.mxu0 %v1805
    %2303 = vmatpush.bf16.msra.mxu0 %v1801
    %2304 = vmatpush.bf16.msra.mxu0 %v1797
    %2305 = vmatpush.bf16.msra.mxu0 %v1793
    %2306 = vmatpush.bf16.msra.mxu0 %v1789
    %2307 = vmatpush.bf16.msra.mxu0 %v1785
    %2308 = vmatpush.bf16.msra.mxu0 %v1781
    %2309 = vmatmul.bf16.gmra.mxu0 %v583
    %v2310 = vpop.f32.mrf.mxu0
    %v2311 = vadd.f32 %v2298, %v2310
    %v2312 = vpop.f32.mrf.mxu0
    %2313 = vdwg.mxu0
    %2314 = vmatpush.bf16.msra.mxu0 %v1841
    %2315 = vmatpush.bf16.msra.mxu0 %v1837
    %2316 = vmatpush.bf16.msra.mxu0 %v1833
    %2317 = vmatpush.bf16.msra.mxu0 %v1829
    %2318 = vmatpush.bf16.msra.mxu0 %v1825
    %2319 = vmatpush.bf16.msra.mxu0 %v1821
    %2320 = vmatpush.bf16.msra.mxu0 %v1817
    %2321 = vmatpush.bf16.msra.mxu0 %v1813
    %2322 = vmatmul.bf16.gmra.mxu0 %v584
    %v2323 = vpop.f32.mrf.mxu0
    %v2324 = vadd.f32 %v2311, %v2323
    %v2325 = vpop.f32.mrf.mxu0
    %2326 = vdwg.mxu0
    %2327 = vmatpush.bf16.msra.mxu0 %v1873
    %2328 = vmatpush.bf16.msra.mxu0 %v1869
    %2329 = vmatpush.bf16.msra.mxu0 %v1865
    %2330 = vmatpush.bf16.msra.mxu0 %v1861
    %2331 = vmatpush.bf16.msra.mxu0 %v1857
    %2332 = vmatpush.bf16.msra.mxu0 %v1853
    %2333 = vmatpush.bf16.msra.mxu0 %v1849
    %2334 = vmatpush.bf16.msra.mxu0 %v1845
    %2335 = vmatmul.bf16.gmra.mxu0 %v585
    %v2336 = vpop.f32.mrf.mxu0
    %v2337 = vadd.f32 %v2324, %v2336
    %v2338 = vpop.f32.mrf.mxu0
    %2339 = vdwg.mxu0
    %2340 = vmatpush.bf16.msra.mxu0 %v1650
    %2341 = vmatpush.bf16.msra.mxu0 %v1646
    %2342 = vmatpush.bf16.msra.mxu0 %v1642
    %2343 = vmatpush.bf16.msra.mxu0 %v1638
    %2344 = vmatpush.bf16.msra.mxu0 %v1634
    %2345 = vmatpush.bf16.msra.mxu0 %v1630
    %2346 = vmatpush.bf16.msra.mxu0 %v1626
    %2347 = vmatpush.bf16.msra.mxu0 %v1622
    %2348 = vmatmul.bf16.gmra.mxu0 %v578
    %v2349 = vpop.f32.mrf.mxu0
    %v2350 = vadd.f32 %v846, %v2349
    %v2351 = vpop.f32.mrf.mxu0
    %2352 = vdwg.mxu0
    %2353 = vmatpush.bf16.msra.mxu0 %v1682
    %2354 = vmatpush.bf16.msra.mxu0 %v1678
    %2355 = vmatpush.bf16.msra.mxu0 %v1674
    %2356 = vmatpush.bf16.msra.mxu0 %v1670
    %2357 = vmatpush.bf16.msra.mxu0 %v1666
    %2358 = vmatpush.bf16.msra.mxu0 %v1662
    %2359 = vmatpush.bf16.msra.mxu0 %v1658
    %2360 = vmatpush.bf16.msra.mxu0 %v1654
    %2361 = vmatmul.bf16.gmra.mxu0 %v579
    %v2362 = vpop.f32.mrf.mxu0
    %v2363 = vadd.f32 %v2350, %v2362
    %v2364 = vpop.f32.mrf.mxu0
    %2365 = vdwg.mxu0
    %2366 = vmatpush.bf16.msra.mxu0 %v1714
    %2367 = vmatpush.bf16.msra.mxu0 %v1710
    %2368 = vmatpush.bf16.msra.mxu0 %v1706
    %2369 = vmatpush.bf16.msra.mxu0 %v1702
    %2370 = vmatpush.bf16.msra.mxu0 %v1698
    %2371 = vmatpush.bf16.msra.mxu0 %v1694
    %2372 = vmatpush.bf16.msra.mxu0 %v1690
    %2373 = vmatpush.bf16.msra.mxu0 %v1686
    %2374 = vmatmul.bf16.gmra.mxu0 %v580
    %v2375 = vpop.f32.mrf.mxu0
    %v2376 = vadd.f32 %v2363, %v2375
    %v2377 = vpop.f32.mrf.mxu0
    %2378 = vdwg.mxu0
    %2379 = vmatpush.bf16.msra.mxu0 %v1746
    %2380 = vmatpush.bf16.msra.mxu0 %v1742
    %2381 = vmatpush.bf16.msra.mxu0 %v1738
    %2382 = vmatpush.bf16.msra.mxu0 %v1734
    %2383 = vmatpush.bf16.msra.mxu0 %v1730
    %2384 = vmatpush.bf16.msra.mxu0 %v1726
    %2385 = vmatpush.bf16.msra.mxu0 %v1722
    %2386 = vmatpush.bf16.msra.mxu0 %v1718
    %2387 = vmatmul.bf16.gmra.mxu0 %v581
    %v2388 = vpop.f32.mrf.mxu0
    %v2389 = vadd.f32 %v2376, %v2388
    %v2390 = vpop.f32.mrf.mxu0
    %2391 = vdwg.mxu0
    %2392 = vmatpush.bf16.msra.mxu0 %v1778
    %2393 = vmatpush.bf16.msra.mxu0 %v1774
    %2394 = vmatpush.bf16.msra.mxu0 %v1770
    %2395 = vmatpush.bf16.msra.mxu0 %v1766
    %2396 = vmatpush.bf16.msra.mxu0 %v1762
    %2397 = vmatpush.bf16.msra.mxu0 %v1758
    %2398 = vmatpush.bf16.msra.mxu0 %v1754
    %2399 = vmatpush.bf16.msra.mxu0 %v1750
    %2400 = vmatmul.bf16.gmra.mxu0 %v582
    %v2401 = vpop.f32.mrf.mxu0
    %v2402 = vadd.f32 %v2389, %v2401
    %v2403 = vpop.f32.mrf.mxu0
    %2404 = vdwg.mxu0
    %2405 = vmatpush.bf16.msra.mxu0 %v1810
    %2406 = vmatpush.bf16.msra.mxu0 %v1806
    %2407 = vmatpush.bf16.msra.mxu0 %v1802
    %2408 = vmatpush.bf16.msra.mxu0 %v1798
    %2409 = vmatpush.bf16.msra.mxu0 %v1794
    %2410 = vmatpush.bf16.msra.mxu0 %v1790
    %2411 = vmatpush.bf16.msra.mxu0 %v1786
    %2412 = vmatpush.bf16.msra.mxu0 %v1782
    %2413 = vmatmul.bf16.gmra.mxu0 %v583
    %v2414 = vpop.f32.mrf.mxu0
    %v2415 = vadd.f32 %v2402, %v2414
    %v2416 = vpop.f32.mrf.mxu0
    %2417 = vdwg.mxu0
    %2418 = vmatpush.bf16.msra.mxu0 %v1842
    %2419 = vmatpush.bf16.msra.mxu0 %v1838
    %2420 = vmatpush.bf16.msra.mxu0 %v1834
    %2421 = vmatpush.bf16.msra.mxu0 %v1830
    %2422 = vmatpush.bf16.msra.mxu0 %v1826
    %2423 = vmatpush.bf16.msra.mxu0 %v1822
    %2424 = vmatpush.bf16.msra.mxu0 %v1818
    %2425 = vmatpush.bf16.msra.mxu0 %v1814
    %2426 = vmatmul.bf16.gmra.mxu0 %v584
    %v2427 = vpop.f32.mrf.mxu0
    %v2428 = vadd.f32 %v2415, %v2427
    %v2429 = vpop.f32.mrf.mxu0
    %2430 = vdwg.mxu0
    %2431 = vmatpush.bf16.msra.mxu0 %v1874
    %2432 = vmatpush.bf16.msra.mxu0 %v1870
    %2433 = vmatpush.bf16.msra.mxu0 %v1866
    %2434 = vmatpush.bf16.msra.mxu0 %v1862
    %2435 = vmatpush.bf16.msra.mxu0 %v1858
    %2436 = vmatpush.bf16.msra.mxu0 %v1854
    %2437 = vmatpush.bf16.msra.mxu0 %v1850
    %2438 = vmatpush.bf16.msra.mxu0 %v1846
    %2439 = vmatmul.bf16.gmra.mxu0 %v585
    %v2440 = vpop.f32.mrf.mxu0
    %v2441 = vadd.f32 %v2428, %v2440
    %v2442 = vpop.f32.mrf.mxu0
    %2443 = vdwg.mxu0
    %2444 = vmatpush.bf16.msra.mxu0 %v1651
    %2445 = vmatpush.bf16.msra.mxu0 %v1647
    %2446 = vmatpush.bf16.msra.mxu0 %v1643
    %2447 = vmatpush.bf16.msra.mxu0 %v1639
    %2448 = vmatpush.bf16.msra.mxu0 %v1635
    %2449 = vmatpush.bf16.msra.mxu0 %v1631
    %2450 = vmatpush.bf16.msra.mxu0 %v1627
    %2451 = vmatpush.bf16.msra.mxu0 %v1623
    %2452 = vmatmul.bf16.gmra.mxu0 %v578
    %v2453 = vpop.f32.mrf.mxu0
    %v2454 = vadd.f32 %v847, %v2453
    %v2455 = vpop.f32.mrf.mxu0
    %2456 = vdwg.mxu0
    %2457 = vmatpush.bf16.msra.mxu0 %v1683
    %2458 = vmatpush.bf16.msra.mxu0 %v1679
    %2459 = vmatpush.bf16.msra.mxu0 %v1675
    %2460 = vmatpush.bf16.msra.mxu0 %v1671
    %2461 = vmatpush.bf16.msra.mxu0 %v1667
    %2462 = vmatpush.bf16.msra.mxu0 %v1663
    %2463 = vmatpush.bf16.msra.mxu0 %v1659
    %2464 = vmatpush.bf16.msra.mxu0 %v1655
    %2465 = vmatmul.bf16.gmra.mxu0 %v579
    %v2466 = vpop.f32.mrf.mxu0
    %v2467 = vadd.f32 %v2454, %v2466
    %v2468 = vpop.f32.mrf.mxu0
    %2469 = vdwg.mxu0
    %2470 = vmatpush.bf16.msra.mxu0 %v1715
    %2471 = vmatpush.bf16.msra.mxu0 %v1711
    %2472 = vmatpush.bf16.msra.mxu0 %v1707
    %2473 = vmatpush.bf16.msra.mxu0 %v1703
    %2474 = vmatpush.bf16.msra.mxu0 %v1699
    %2475 = vmatpush.bf16.msra.mxu0 %v1695
    %2476 = vmatpush.bf16.msra.mxu0 %v1691
    %2477 = vmatpush.bf16.msra.mxu0 %v1687
    %2478 = vmatmul.bf16.gmra.mxu0 %v580
    %v2479 = vpop.f32.mrf.mxu0
    %v2480 = vadd.f32 %v2467, %v2479
    %v2481 = vpop.f32.mrf.mxu0
    %2482 = vdwg.mxu0
    %2483 = vmatpush.bf16.msra.mxu0 %v1747
    %2484 = vmatpush.bf16.msra.mxu0 %v1743
    %2485 = vmatpush.bf16.msra.mxu0 %v1739
    %2486 = vmatpush.bf16.msra.mxu0 %v1735
    %2487 = vmatpush.bf16.msra.mxu0 %v1731
    %2488 = vmatpush.bf16.msra.mxu0 %v1727
    %2489 = vmatpush.bf16.msra.mxu0 %v1723
    %2490 = vmatpush.bf16.msra.mxu0 %v1719
    %2491 = vmatmul.bf16.gmra.mxu0 %v581
    %v2492 = vpop.f32.mrf.mxu0
    %v2493 = vadd.f32 %v2480, %v2492
    %v2494 = vpop.f32.mrf.mxu0
    %2495 = vdwg.mxu0
    %2496 = vmatpush.bf16.msra.mxu0 %v1779
    %2497 = vmatpush.bf16.msra.mxu0 %v1775
    %2498 = vmatpush.bf16.msra.mxu0 %v1771
    %2499 = vmatpush.bf16.msra.mxu0 %v1767
    %2500 = vmatpush.bf16.msra.mxu0 %v1763
    %2501 = vmatpush.bf16.msra.mxu0 %v1759
    %2502 = vmatpush.bf16.msra.mxu0 %v1755
    %2503 = vmatpush.bf16.msra.mxu0 %v1751
    %2504 = vmatmul.bf16.gmra.mxu0 %v582
    %v2505 = vpop.f32.mrf.mxu0
    %v2506 = vadd.f32 %v2493, %v2505
    %v2507 = vpop.f32.mrf.mxu0
    %2508 = vdwg.mxu0
    %2509 = vmatpush.bf16.msra.mxu0 %v1811
    %2510 = vmatpush.bf16.msra.mxu0 %v1807
    %2511 = vmatpush.bf16.msra.mxu0 %v1803
    %2512 = vmatpush.bf16.msra.mxu0 %v1799
    %2513 = vmatpush.bf16.msra.mxu0 %v1795
    %2514 = vmatpush.bf16.msra.mxu0 %v1791
    %2515 = vmatpush.bf16.msra.mxu0 %v1787
    %2516 = vmatpush.bf16.msra.mxu0 %v1783
    %2517 = vmatmul.bf16.gmra.mxu0 %v583
    %v2518 = vpop.f32.mrf.mxu0
    %v2519 = vadd.f32 %v2506, %v2518
    %v2520 = vpop.f32.mrf.mxu0
    %2521 = vdwg.mxu0
    %2522 = vmatpush.bf16.msra.mxu0 %v1843
    %2523 = vmatpush.bf16.msra.mxu0 %v1839
    %2524 = vmatpush.bf16.msra.mxu0 %v1835
    %2525 = vmatpush.bf16.msra.mxu0 %v1831
    %2526 = vmatpush.bf16.msra.mxu0 %v1827
    %2527 = vmatpush.bf16.msra.mxu0 %v1823
    %2528 = vmatpush.bf16.msra.mxu0 %v1819
    %2529 = vmatpush.bf16.msra.mxu0 %v1815
    %2530 = vmatmul.bf16.gmra.mxu0 %v584
    %v2531 = vpop.f32.mrf.mxu0
    %v2532 = vadd.f32 %v2519, %v2531
    %v2533 = vpop.f32.mrf.mxu0
    %2534 = vdwg.mxu0
    %2535 = vmatpush.bf16.msra.mxu0 %v1875
    %2536 = vmatpush.bf16.msra.mxu0 %v1871
    %2537 = vmatpush.bf16.msra.mxu0 %v1867
    %2538 = vmatpush.bf16.msra.mxu0 %v1863
    %2539 = vmatpush.bf16.msra.mxu0 %v1859
    %2540 = vmatpush.bf16.msra.mxu0 %v1855
    %2541 = vmatpush.bf16.msra.mxu0 %v1851
    %2542 = vmatpush.bf16.msra.mxu0 %v1847
    %2543 = vmatmul.bf16.gmra.mxu0 %v585
    %v2544 = vpop.f32.mrf.mxu0
    %v2545 = vadd.f32 %v2532, %v2544
    %v2546 = vpop.f32.mrf.mxu0
    %2547 = vdwg.mxu0
    %v2548 = vmax.f32 %v2233, 0.0
    %v2549 = vmax.f32 %v2337, 0.0
    %v2550 = vmax.f32 %v2441, 0.0
    %v2551 = vmax.f32 %v2545, 0.0
    %2552 = vst [vmem:[#allocation8] sm:$0xff] %v2548
    %2553 = vst [vmem:[#allocation8 + $0x8] sm:$0xff] %v2549
    %2554 = vst [vmem:[#allocation8 + $0x10] sm:$0xff] %v2550
    %2555 = vst [vmem:[#allocation8 + $0x18] sm:$0xff] %v2551
    %v2556 = vld [vmem:[%s5] sm:$0xf]
    %v2558 = vperm.slane %v2556, 0
    %v2559 = vperm.slane %v2556, 1
    %v2560 = vperm.slane %v2556, 2
    %v2561 = vperm.slane %v2556, 3
    %v2566 = vmul.f32 %v2548, %v2558
    %v2567 = vmul.f32 %v2549, %v2559
    %v2568 = vmul.f32 %v2550, %v2560
    %v2569 = vmul.f32 %v2551, %v2561
    %v2570 = vadd.f32 %v2566, %v2567
    %v2571 = vadd.f32 %v2570, %v2568
    %v2572 = vadd.f32 %v2571, %v2569
    %2573 = vadd.xlane.f32.xlu0 %v2572
    %v2574 = vpop.xlane.xlu0 %2573
    %v2575 = vld [vmem:[#allocation2] sm:$0x1]
    %v2577 = vperm.slane %v2575, 0
    %v2579 = vadd.f32 %v2574, %v2577
    %vm2580 = vcmask 7168
    %2581 = vst.msk [vmem:[%s7] sm:$0xff] %vm2580, %v2579
    // Predicated region
    $region38: #{predictor_forward.1} parent=1 // pred_check
      _
    $region39: #{predictor_forward.1} parent=1 // pred_check_branch
      %2583 = sbr.rel (0) target = $region41
    $region40: #{predictor_forward.1} parent=1 // pred_region
      _
    $region41: #{predictor_forward.1} parent=1 // pred_fallthru
      _
    // Predicated region
    $region42: #{predictor_forward.1} parent=1 // pred_check
      _
    $region43: #{predictor_forward.1} parent=1 // pred_check_branch
      %2585 = sbr.rel (0) target = $region45
    $region44: #{predictor_forward.1} parent=1 // pred_region
      %2587 = vsyncadd [#allocation5], 0
      %s2589 = sshll.u32 [#allocation8], 4
      %s2590 = int_to_ptr.vmem [resolvable:$true] %s2589
      %s2591 = sshll.u32 %s8, 4
      %s2592 = int_to_ptr.hbm [resolvable:$true] %s2591
      %2594 = dma.vmem_to_hbm [thread:$0]  %s2590, 512, %s2592, [#allocation5]
    $region45: #{predictor_forward.1} parent=1 // pred_fallthru
      _
    // Predicated region
    $region46: #{predictor_forward.1} parent=1 // pred_check
      _
    $region47: #{predictor_forward.1} parent=1 // pred_check_branch
      %2596 = sbr.rel (0) target = $region49
    $region48: #{predictor_forward.1} parent=1 // pred_region
      _
    $region49: #{predictor_forward.1} parent=1 // pred_fallthru
      _
    // Predicated region
    $region50: #{predictor_forward.1} parent=1 // pred_check
      _
    $region51: #{predictor_forward.1} parent=1 // pred_check_branch
      %2598 = sbr.rel (0) target = $region53
    $region52: #{predictor_forward.1} parent=1 // pred_region
      %2600 = dma.done [#allocation5], 512
    $region53: #{predictor_forward.1} parent=1 // pred_fallthru
      _
    %2601 = vsyncpa [#allocation4], 1
    %2602 = vsyncpa [#allocation7], 1
    %2603 = vsyncpa [#allocation5], 1

</llo_original>
